<compile_context>
chip_gen: v6e
topology: v6e:2x2x1
jax: 0.10.0
libtpu: 0.0.40
codegen_flags: <defaults>
</compile_context>

<pallas_src>
import jax
import jax.numpy as jnp
from jax import lax
from jax.experimental import pallas as pl
from jax.experimental.pallas import tpu as pltpu
import numpy as np


# ----------------------------- Pallas kernel --------------------------------

def _down_fused_kernel(x_ref, w1_ref, s1_ref, b1_ref, w2_ref, s2_ref, b2_ref,
                       o_ref, ppad_ref, ypad_ref):
    # x_ref:   (1, Hp, 2, Wp, 2*Cin_p)  input image, pool window exposed
    # w1_ref:  (9*Cin_p, Cout_p)        conv1 weights, tap-major
    # s1/b1:   (1, Cout_p)              folded BN scale / shift (incl. bias)
    # w2_ref:  (9*Cout_p, Cout_p)       conv2 weights
    # o_ref:   (1, Hp, Wp, Cout_p)
    # ppad_ref:(Hp+2, Wp+2, Cin_p)      VMEM halo scratch for pooled input
    # ypad_ref:(Hp+2, Wp+2, Cout_p)     VMEM halo scratch for conv1 output
    hp, wp, cout_p = o_ref.shape[1], o_ref.shape[2], o_ref.shape[3]
    cin_p = x_ref.shape[-1] // 2

    # ---- fused 2x2 max-pool: four aligned slices, all in VMEM ----
    x_even = x_ref[0, :, 0, :, :]                      # rows 0,2,4,...  (hp,wp,2*cin_p)
    x_odd = x_ref[0, :, 1, :, :]                       # rows 1,3,5,...
    pooled = jnp.maximum(
        jnp.maximum(x_even[:, :, :cin_p], x_even[:, :, cin_p:]),
        jnp.maximum(x_odd[:, :, :cin_p], x_odd[:, :, cin_p:]))   # (hp, wp, cin_p)

    # ---- conv1: zero-ring halo in scratch, 9 taps -> ONE MXU matmul ----
    ppad_ref[...] = jnp.zeros_like(ppad_ref)
    ppad_ref[1:hp + 1, 1:wp + 1, :] = pooled
    cols1 = jnp.concatenate(
        [ppad_ref[ky:ky + hp, kx:kx + wp, :]
         for ky in range(3) for kx in range(3)],
        axis=-1).reshape(hp * wp, 9 * cin_p)
    y1 = jnp.dot(cols1, w1_ref[...], preferred_element_type=jnp.float32)
    y1 = jnp.maximum(y1 * s1_ref[...] + b1_ref[...], 0.0)        # BN + ReLU

    # ---- conv2: intermediate stays in VMEM, never touches HBM ----
    ypad_ref[...] = jnp.zeros_like(ypad_ref)
    ypad_ref[1:hp + 1, 1:wp + 1, :] = y1.reshape(hp, wp, cout_p)
    cols2 = jnp.concatenate(
        [ypad_ref[ky:ky + hp, kx:kx + wp, :]
         for ky in range(3) for kx in range(3)],
        axis=-1).reshape(hp * wp, 9 * cout_p)
    y2 = jnp.dot(cols2, w2_ref[...], preferred_element_type=jnp.float32)
    y2 = jnp.maximum(y2 * s2_ref[...] + b2_ref[...], 0.0)        # BN + ReLU

    o_ref[0] = y2.reshape(hp, wp, cout_p).astype(o_ref.dtype)


# ----------------------------- wrapper ---------------------------------------

def down_forward(x_nchw, p, out_channels):
    n, cin, h, w = x_nchw.shape
    hp, wp = h // 2, w // 2
    cin_p = p["w1"].shape[0] // 9
    cout_p = p["w1"].shape[1]

    x = jnp.transpose(x_nchw, (0, 2, 3, 1))                       # NCHW -> NHWC
    x = x[:, :2 * hp, :2 * wp, :]                                 # floor, like MaxPool2d(2)
    x = jnp.pad(x, ((0, 0), (0, 0), (0, 0), (0, cin_p - cin)))    # lane-pad channels
    x = x.reshape(n, hp, 2, wp, 2 * cin_p)                        # free metadata reshape

    out = pl.pallas_call(
        _down_fused_kernel,
        out_shape=jax.ShapeDtypeStruct((n, hp, wp, cout_p), jnp.float32),
        grid=(n,),
        in_specs=[
            pl.BlockSpec((1, hp, 2, wp, 2 * cin_p), lambda b: (b, 0, 0, 0, 0)),
            pl.BlockSpec((9 * cin_p, cout_p), lambda b: (0, 0)),   # resident weights
            pl.BlockSpec((1, cout_p), lambda b: (0, 0)),
            pl.BlockSpec((1, cout_p), lambda b: (0, 0)),
            pl.BlockSpec((9 * cout_p, cout_p), lambda b: (0, 0)),  # resident weights
            pl.BlockSpec((1, cout_p), lambda b: (0, 0)),
            pl.BlockSpec((1, cout_p), lambda b: (0, 0)),
        ],
        out_specs=pl.BlockSpec((1, hp, wp, cout_p), lambda b: (b, 0, 0, 0)),
        scratch_shapes=[
            pltpu.VMEM((hp + 2, wp + 2, cin_p), jnp.float32),
            pltpu.VMEM((hp + 2, wp + 2, cout_p), jnp.float32),
        ],
        compiler_params=pltpu.CompilerParams(
            dimension_semantics=("parallel",)),
    )(x, p["w1"], p["scale1"], p["shift1"], p["w2"], p["scale2"], p["shift2"])

    out = out[:, :, :, :out_channels]                             # drop lane padding
    return jnp.transpose(out, (0, 3, 1, 2))                       # NHWC -> NCHW


# ----------------------------- parameters ------------------------------------

def _round_up(v, m):
    return (v + m - 1) // m * m


def make_params(key, cin, cout, eps=1e-5):
    ks = jax.random.split(key, 12)
    raw = dict(
        w1=jax.random.normal(ks[0], (cout, cin, 3, 3), jnp.float32) * 0.1,
        b1=jax.random.normal(ks[1], (cout,), jnp.float32) * 0.1,
        g1=1.0 + 0.1 * jax.random.normal(ks[2], (cout,), jnp.float32),
        beta1=0.1 * jax.random.normal(ks[3], (cout,), jnp.float32),
        m1=0.1 * jax.random.normal(ks[4], (cout,), jnp.float32),
        v1=0.5 + jax.random.uniform(ks[5], (cout,), jnp.float32),
        w2=jax.random.normal(ks[6], (cout, cout, 3, 3), jnp.float32) * 0.1,
        b2=jax.random.normal(ks[7], (cout,), jnp.float32) * 0.1,
        g2=1.0 + 0.1 * jax.random.normal(ks[8], (cout,), jnp.float32),
        beta2=0.1 * jax.random.normal(ks[9], (cout,), jnp.float32),
        m2=0.1 * jax.random.normal(ks[10], (cout,), jnp.float32),
        v2=0.5 + jax.random.uniform(ks[11], (cout,), jnp.float32),
    )
    cin_p = _round_up(cin, 128)
    cout_p = _round_up(cout, 128)

    # Fold conv bias + eval-mode BatchNorm into per-channel (scale, shift),
    # pad channels to lane-dense multiples of 128 (zeros are exact no-ops:
    # padded weights/scale/shift are 0, so padded outputs are relu(0)=0).
    def fold(w, b, g, beta, m, v, ci_pad, co_pad):
        co, ci = w.shape[0], w.shape[1]
        scale = g / jnp.sqrt(v + eps)
        shift = beta + (b - m) * scale
        w_t = jnp.transpose(w, (2, 3, 1, 0))                      # (ky, kx, ci, co)
        w_t = jnp.pad(w_t, ((0, 0), (0, 0), (0, ci_pad - ci), (0, co_pad - co)))
        w9 = w_t.reshape(9 * ci_pad, co_pad)                      # tap-major, matches cols
        scale_p = jnp.pad(scale, (0, co_pad - co))[None, :]
        shift_p = jnp.pad(shift, (0, co_pad - co))[None, :]
        return w9, scale_p, shift_p

    w1, s1, sh1 = fold(raw["w1"], raw["b1"], raw["g1"], raw["beta1"],
                       raw["m1"], raw["v1"], cin_p, cout_p)
    w2, s2, sh2 = fold(raw["w2"], raw["b2"], raw["g2"], raw["beta2"],
                       raw["m2"], raw["v2"], cout_p, cout_p)
    folded = dict(w1=w1, scale1=s1, shift1=sh1,
                  w2=w2, scale2=s2, shift2=sh2)
    return raw, folded


# ----------------------------- reference (plain JAX) -------------------------

def ref_forward(x_nchw, raw, eps=1e-5):
    n, c, h, w = x_nchw.shape
    pooled = jnp.max(x_nchw.reshape(n, c, h // 2, 2, w // 2, 2), axis=(3, 5))

    def conv_bn_relu(x, wgt, b, g, beta, m, v):
        y = lax.conv_general_dilated(
            x, wgt, (1, 1), "SAME",
            dimension_numbers=("NCHW", "OIHW", "NCHW"))
        y = y + b[None, :, None, None]
        y = (y - m[None, :, None, None]) / jnp.sqrt(v[None, :, None, None] + eps)
        y = y * g[None, :, None, None] + beta[None, :, None, None]
        return jnp.maximum(y, 0.0)

    y = conv_bn_relu(pooled, raw["w1"], raw["b1"], raw["g1"], raw["beta1"],
                     raw["m1"], raw["v1"])
    y = conv_bn_relu(y, raw["w2"], raw["b2"], raw["g2"], raw["beta2"],
                     raw["m2"], raw["v2"])
    return y


# ----------------------------- main -------------------------------------------

if __name__ == "__main__":
    key = jax.random.PRNGKey(0)
    k_x, k_p = jax.random.split(key)

    N, Cin, H, W = 2, 4, 16, 16
    Cout = 8
    x = jax.random.normal(k_x, (N, Cin, H, W), jnp.float32)

    raw, folded = make_params(k_p, Cin, Cout)

    fwd = jax.jit(down_forward, static_argnums=(2,))
    out = jax.block_until_ready(fwd(x, folded, Cout))

    ref = jax.block_until_ready(ref_forward(x, raw))

    assert out.shape == (N, Cout, H // 2, W // 2), out.shape
    np.testing.assert_allclose(np.asarray(out), np.asarray(ref),
                               rtol=2e-3, atol=2e-3)
    print("KERNEL_OK")
</pallas_src>

<mosaic_0001>
module attributes {stable_mosaic.version = 11 : i64} {
  func.func @_down_fused_kernel(%arg0: i32, %arg1: memref<1x8x2x8x256xf32, #tpu.memory_space<vmem>>, %arg2: memref<1152x128xf32, #tpu.memory_space<vmem>>, %arg3: memref<1x128xf32, #tpu.memory_space<vmem>>, %arg4: memref<1x128xf32, #tpu.memory_space<vmem>>, %arg5: memref<1152x128xf32, #tpu.memory_space<vmem>>, %arg6: memref<1x128xf32, #tpu.memory_space<vmem>>, %arg7: memref<1x128xf32, #tpu.memory_space<vmem>>, %arg8: memref<1x8x8x128xf32, #tpu.memory_space<vmem>>, %arg9: memref<10x10x128xf32, #tpu.memory_space<vmem>>, %arg10: memref<10x10x128xf32, #tpu.memory_space<vmem>>) attributes {dimension_semantics = [#tpu.dimension_semantics<parallel>], iteration_bounds = array<i64: 2>, scalar_prefetch = 0 : i64, scratch_operands = 2 : i64, tpu.core_type = #tpu.core_type<tc>, window_params = [{transform_indices = @transform_0, window_bounds = array<i64: 1, 8, 2, 8, 256>}, {pipeline_mode = #tpu.pipeline_mode<synchronous>, transform_indices = @transform_1, window_bounds = array<i64: 1152, 128>}, {pipeline_mode = #tpu.pipeline_mode<synchronous>, transform_indices = @transform_2, window_bounds = array<i64: 1, 128>}, {pipeline_mode = #tpu.pipeline_mode<synchronous>, transform_indices = @transform_3, window_bounds = array<i64: 1, 128>}, {pipeline_mode = #tpu.pipeline_mode<synchronous>, transform_indices = @transform_4, window_bounds = array<i64: 1152, 128>}, {pipeline_mode = #tpu.pipeline_mode<synchronous>, transform_indices = @transform_5, window_bounds = array<i64: 1, 128>}, {pipeline_mode = #tpu.pipeline_mode<synchronous>, transform_indices = @transform_6, window_bounds = array<i64: 1, 128>}, {transform_indices = @transform_7, window_bounds = array<i64: 1, 8, 8, 128>}]} {
    %c0 = arith.constant 0 : index
    %c0_0 = arith.constant 0 : index
    %c0_1 = arith.constant 0 : index
    %c0_2 = arith.constant 0 : index
    %c0_3 = arith.constant 0 : index
    %0 = vector.load %arg1[%c0, %c0_0, %c0_1, %c0_2, %c0_3] : memref<1x8x2x8x256xf32, #tpu.memory_space<vmem>>, vector<1x8x1x8x256xf32>
    %1 = vector.shape_cast %0 : vector<1x8x1x8x256xf32> to vector<8x8x256xf32>
    %c0_4 = arith.constant 0 : index
    %c0_5 = arith.constant 0 : index
    %c1 = arith.constant 1 : index
    %c0_6 = arith.constant 0 : index
    %c0_7 = arith.constant 0 : index
    %2 = vector.load %arg1[%c0_4, %c0_5, %c1, %c0_6, %c0_7] : memref<1x8x2x8x256xf32, #tpu.memory_space<vmem>>, vector<1x8x1x8x256xf32>
    %3 = vector.shape_cast %2 : vector<1x8x1x8x256xf32> to vector<8x8x256xf32>
    %4 = vector.extract_strided_slice %1 {offsets = [0, 0, 0], sizes = [8, 8, 128], strides = [1, 1, 1]} : vector<8x8x256xf32> to vector<8x8x128xf32>
    %5 = vector.extract_strided_slice %1 {offsets = [0, 0, 128], sizes = [8, 8, 128], strides = [1, 1, 1]} : vector<8x8x256xf32> to vector<8x8x128xf32>
    %6 = arith.maximumf %4, %5 : vector<8x8x128xf32>
    %7 = vector.extract_strided_slice %3 {offsets = [0, 0, 0], sizes = [8, 8, 128], strides = [1, 1, 1]} : vector<8x8x256xf32> to vector<8x8x128xf32>
    %8 = vector.extract_strided_slice %3 {offsets = [0, 0, 128], sizes = [8, 8, 128], strides = [1, 1, 1]} : vector<8x8x256xf32> to vector<8x8x128xf32>
    %9 = arith.maximumf %7, %8 : vector<8x8x128xf32>
    %10 = arith.maximumf %6, %9 : vector<8x8x128xf32>
    %cst = arith.constant 0.000000e+00 : f32
    %11 = vector.broadcast %cst : f32 to vector<10x10x128xf32>
    %c0_8 = arith.constant 0 : index
    %c0_9 = arith.constant 0 : index
    %c0_10 = arith.constant 0 : index
    %12 = vector.load %arg9[%c0_8, %c0_9, %c0_10] : memref<10x10x128xf32, #tpu.memory_space<vmem>>, vector<10x10x128xf32>
    tpu.vector_store %arg9[%c0_8, %c0_9, %c0_10], %11 {strides = array<i32>} : memref<10x10x128xf32, #tpu.memory_space<vmem>>, vector<10x10x128xf32>,
    %c1_11 = arith.constant 1 : index
    %c1_12 = arith.constant 1 : index
    %c0_13 = arith.constant 0 : index
    %13 = vector.load %arg9[%c1_11, %c1_12, %c0_13] : memref<10x10x128xf32, #tpu.memory_space<vmem>>, vector<8x8x128xf32>
    tpu.vector_store %arg9[%c1_11, %c1_12, %c0_13], %10 {strides = array<i32>} : memref<10x10x128xf32, #tpu.memory_space<vmem>>, vector<8x8x128xf32>,
    %c0_14 = arith.constant 0 : index
    %c0_15 = arith.constant 0 : index
    %c0_16 = arith.constant 0 : index
    %14 = vector.load %arg9[%c0_14, %c0_15, %c0_16] : memref<10x10x128xf32, #tpu.memory_space<vmem>>, vector<8x8x128xf32>
    %c0_17 = arith.constant 0 : index
    %c1_18 = arith.constant 1 : index
    %c0_19 = arith.constant 0 : index
    %15 = vector.load %arg9[%c0_17, %c1_18, %c0_19] : memref<10x10x128xf32, #tpu.memory_space<vmem>>, vector<8x8x128xf32>
    %c0_20 = arith.constant 0 : index
    %c2 = arith.constant 2 : index
    %c0_21 = arith.constant 0 : index
    %16 = vector.load %arg9[%c0_20, %c2, %c0_21] : memref<10x10x128xf32, #tpu.memory_space<vmem>>, vector<8x8x128xf32>
    %c1_22 = arith.constant 1 : index
    %c0_23 = arith.constant 0 : index
    %c0_24 = arith.constant 0 : index
    %17 = vector.load %arg9[%c1_22, %c0_23, %c0_24] : memref<10x10x128xf32, #tpu.memory_space<vmem>>, vector<8x8x128xf32>
    %c1_25 = arith.constant 1 : index
    %c1_26 = arith.constant 1 : index
    %c0_27 = arith.constant 0 : index
    %18 = vector.load %arg9[%c1_25, %c1_26, %c0_27] : memref<10x10x128xf32, #tpu.memory_space<vmem>>, vector<8x8x128xf32>
    %c1_28 = arith.constant 1 : index
    %c2_29 = arith.constant 2 : index
    %c0_30 = arith.constant 0 : index
    %19 = vector.load %arg9[%c1_28, %c2_29, %c0_30] : memref<10x10x128xf32, #tpu.memory_space<vmem>>, vector<8x8x128xf32>
    %c2_31 = arith.constant 2 : index
    %c0_32 = arith.constant 0 : index
    %c0_33 = arith.constant 0 : index
    %20 = vector.load %arg9[%c2_31, %c0_32, %c0_33] : memref<10x10x128xf32, #tpu.memory_space<vmem>>, vector<8x8x128xf32>
    %c2_34 = arith.constant 2 : index
    %c1_35 = arith.constant 1 : index
    %c0_36 = arith.constant 0 : index
    %21 = vector.load %arg9[%c2_34, %c1_35, %c0_36] : memref<10x10x128xf32, #tpu.memory_space<vmem>>, vector<8x8x128xf32>
    %c2_37 = arith.constant 2 : index
    %c2_38 = arith.constant 2 : index
    %c0_39 = arith.constant 0 : index
    %22 = vector.load %arg9[%c2_37, %c2_38, %c0_39] : memref<10x10x128xf32, #tpu.memory_space<vmem>>, vector<8x8x128xf32>
    %23 = tpu.concatenate %14, %15, %16, %17, %18, %19, %20, %21, %22 in 2 : vector<8x8x128xf32>, vector<8x8x128xf32>, vector<8x8x128xf32>, vector<8x8x128xf32>, vector<8x8x128xf32>, vector<8x8x128xf32>, vector<8x8x128xf32>, vector<8x8x128xf32>, vector<8x8x128xf32> -> vector<8x8x1152xf32>
    %24 = vector.shape_cast %23 : vector<8x8x1152xf32> to vector<64x1152xf32>
    %c0_40 = arith.constant 0 : index
    %c0_41 = arith.constant 0 : index
    %25 = vector.load %arg2[%c0_40, %c0_41] : memref<1152x128xf32, #tpu.memory_space<vmem>>, vector<1152x128xf32>
    %cst_42 = arith.constant dense<0.000000e+00> : vector<64x128xf32>
    %26 = tpu.matmul %24, %25, %cst_42 {dimension_numbers = #tpu.dot_dimension_numbers<[1], [0], [0], [1], [0, 0, 1, 1], [], []>} : vector<64x1152xf32>, vector<1152x128xf32>, vector<64x128xf32> -> vector<64x128xf32>
    %c0_43 = arith.constant 0 : index
    %c0_44 = arith.constant 0 : index
    %27 = vector.load %arg3[%c0_43, %c0_44] : memref<1x128xf32, #tpu.memory_space<vmem>>, vector<1x128xf32>
    %28 = vector.broadcast %27 : vector<1x128xf32> to vector<64x128xf32>
    %29 = arith.mulf %26, %28 : vector<64x128xf32>
    %c0_45 = arith.constant 0 : index
    %c0_46 = arith.constant 0 : index
    %30 = vector.load %arg4[%c0_45, %c0_46] : memref<1x128xf32, #tpu.memory_space<vmem>>, vector<1x128xf32>
    %31 = vector.broadcast %30 : vector<1x128xf32> to vector<64x128xf32>
    %32 = arith.addf %29, %31 : vector<64x128xf32>
    %cst_47 = arith.constant 0.000000e+00 : f32
    %33 = vector.broadcast %cst_47 : f32 to vector<64x128xf32>
    %34 = arith.maximumf %32, %33 : vector<64x128xf32>
    %cst_48 = arith.constant 0.000000e+00 : f32
    %35 = vector.broadcast %cst_48 : f32 to vector<10x10x128xf32>
    %c0_49 = arith.constant 0 : index
    %c0_50 = arith.constant 0 : index
    %c0_51 = arith.constant 0 : index
    %36 = vector.load %arg10[%c0_49, %c0_50, %c0_51] : memref<10x10x128xf32, #tpu.memory_space<vmem>>, vector<10x10x128xf32>
    tpu.vector_store %arg10[%c0_49, %c0_50, %c0_51], %35 {strides = array<i32>} : memref<10x10x128xf32, #tpu.memory_space<vmem>>, vector<10x10x128xf32>,
    %37 = vector.shape_cast %34 : vector<64x128xf32> to vector<8x8x128xf32>
    %c1_52 = arith.constant 1 : index
    %c1_53 = arith.constant 1 : index
    %c0_54 = arith.constant 0 : index
    %38 = vector.load %arg10[%c1_52, %c1_53, %c0_54] : memref<10x10x128xf32, #tpu.memory_space<vmem>>, vector<8x8x128xf32>
    tpu.vector_store %arg10[%c1_52, %c1_53, %c0_54], %37 {strides = array<i32>} : memref<10x10x128xf32, #tpu.memory_space<vmem>>, vector<8x8x128xf32>,
    %c0_55 = arith.constant 0 : index
    %c0_56 = arith.constant 0 : index
    %c0_57 = arith.constant 0 : index
    %39 = vector.load %arg10[%c0_55, %c0_56, %c0_57] : memref<10x10x128xf32, #tpu.memory_space<vmem>>, vector<8x8x128xf32>
    %c0_58 = arith.constant 0 : index
    %c1_59 = arith.constant 1 : index
    %c0_60 = arith.constant 0 : index
    %40 = vector.load %arg10[%c0_58, %c1_59, %c0_60] : memref<10x10x128xf32, #tpu.memory_space<vmem>>, vector<8x8x128xf32>
    %c0_61 = arith.constant 0 : index
    %c2_62 = arith.constant 2 : index
    %c0_63 = arith.constant 0 : index
    %41 = vector.load %arg10[%c0_61, %c2_62, %c0_63] : memref<10x10x128xf32, #tpu.memory_space<vmem>>, vector<8x8x128xf32>
    %c1_64 = arith.constant 1 : index
    %c0_65 = arith.constant 0 : index
    %c0_66 = arith.constant 0 : index
    %42 = vector.load %arg10[%c1_64, %c0_65, %c0_66] : memref<10x10x128xf32, #tpu.memory_space<vmem>>, vector<8x8x128xf32>
    %c1_67 = arith.constant 1 : index
    %c1_68 = arith.constant 1 : index
    %c0_69 = arith.constant 0 : index
    %43 = vector.load %arg10[%c1_67, %c1_68, %c0_69] : memref<10x10x128xf32, #tpu.memory_space<vmem>>, vector<8x8x128xf32>
    %c1_70 = arith.constant 1 : index
    %c2_71 = arith.constant 2 : index
    %c0_72 = arith.constant 0 : index
    %44 = vector.load %arg10[%c1_70, %c2_71, %c0_72] : memref<10x10x128xf32, #tpu.memory_space<vmem>>, vector<8x8x128xf32>
    %c2_73 = arith.constant 2 : index
    %c0_74 = arith.constant 0 : index
    %c0_75 = arith.constant 0 : index
    %45 = vector.load %arg10[%c2_73, %c0_74, %c0_75] : memref<10x10x128xf32, #tpu.memory_space<vmem>>, vector<8x8x128xf32>
    %c2_76 = arith.constant 2 : index
    %c1_77 = arith.constant 1 : index
    %c0_78 = arith.constant 0 : index
    %46 = vector.load %arg10[%c2_76, %c1_77, %c0_78] : memref<10x10x128xf32, #tpu.memory_space<vmem>>, vector<8x8x128xf32>
    %c2_79 = arith.constant 2 : index
    %c2_80 = arith.constant 2 : index
    %c0_81 = arith.constant 0 : index
    %47 = vector.load %arg10[%c2_79, %c2_80, %c0_81] : memref<10x10x128xf32, #tpu.memory_space<vmem>>, vector<8x8x128xf32>
    %48 = tpu.concatenate %39, %40, %41, %42, %43, %44, %45, %46, %47 in 2 : vector<8x8x128xf32>, vector<8x8x128xf32>, vector<8x8x128xf32>, vector<8x8x128xf32>, vector<8x8x128xf32>, vector<8x8x128xf32>, vector<8x8x128xf32>, vector<8x8x128xf32>, vector<8x8x128xf32> -> vector<8x8x1152xf32>
    %49 = vector.shape_cast %48 : vector<8x8x1152xf32> to vector<64x1152xf32>
    %c0_82 = arith.constant 0 : index
    %c0_83 = arith.constant 0 : index
    %50 = vector.load %arg5[%c0_82, %c0_83] : memref<1152x128xf32, #tpu.memory_space<vmem>>, vector<1152x128xf32>
    %cst_84 = arith.constant dense<0.000000e+00> : vector<64x128xf32>
    %51 = tpu.matmul %49, %50, %cst_84 {dimension_numbers = #tpu.dot_dimension_numbers<[1], [0], [0], [1], [0, 0, 1, 1], [], []>} : vector<64x1152xf32>, vector<1152x128xf32>, vector<64x128xf32> -> vector<64x128xf32>
    %c0_85 = arith.constant 0 : index
    %c0_86 = arith.constant 0 : index
    %52 = vector.load %arg6[%c0_85, %c0_86] : memref<1x128xf32, #tpu.memory_space<vmem>>, vector<1x128xf32>
    %53 = vector.broadcast %52 : vector<1x128xf32> to vector<64x128xf32>
    %54 = arith.mulf %51, %53 : vector<64x128xf32>
    %c0_87 = arith.constant 0 : index
    %c0_88 = arith.constant 0 : index
    %55 = vector.load %arg7[%c0_87, %c0_88] : memref<1x128xf32, #tpu.memory_space<vmem>>, vector<1x128xf32>
    %56 = vector.broadcast %55 : vector<1x128xf32> to vector<64x128xf32>
    %57 = arith.addf %54, %56 : vector<64x128xf32>
    %cst_89 = arith.constant 0.000000e+00 : f32
    %58 = vector.broadcast %cst_89 : f32 to vector<64x128xf32>
    %59 = arith.maximumf %57, %58 : vector<64x128xf32>
    %60 = vector.shape_cast %59 : vector<64x128xf32> to vector<8x8x128xf32>
    %c0_90 = arith.constant 0 : index
    %c0_91 = arith.constant 0 : index
    %c0_92 = arith.constant 0 : index
    %c0_93 = arith.constant 0 : index
    %61 = vector.load %arg8[%c0_90, %c0_91, %c0_92, %c0_93] : memref<1x8x8x128xf32, #tpu.memory_space<vmem>>, vector<1x8x8x128xf32>
    %62 = vector.shape_cast %61 : vector<1x8x8x128xf32> to vector<8x8x128xf32>
    %63 = vector.shape_cast %60 : vector<8x8x128xf32> to vector<1x8x8x128xf32>
    tpu.vector_store %arg8[%c0_90, %c0_91, %c0_92, %c0_93], %63 {strides = array<i32>} : memref<1x8x8x128xf32, #tpu.memory_space<vmem>>, vector<1x8x8x128xf32>,
    return
  }
  func.func @transform_0(%arg0: i32) -> (i32, i32, i32, i32, i32) {
    %c0_i32 = arith.constant 0 : i32
    %c0_i32_0 = arith.constant 0 : i32
    %c0_i32_1 = arith.constant 0 : i32
    %c0_i32_2 = arith.constant 0 : i32
    %c0_i32_3 = arith.constant 0 : i32
    return %arg0, %c0_i32, %c0_i32_0, %c0_i32_1, %c0_i32_2 : i32, i32, i32, i32, i32
  }
  func.func @transform_1(%arg0: i32) -> (i32, i32) {
    %c0_i32 = arith.constant 0 : i32
    %c0_i32_0 = arith.constant 0 : i32
    %c0_i32_1 = arith.constant 0 : i32
    return %c0_i32, %c0_i32_0 : i32, i32
  }
  func.func @transform_2(%arg0: i32) -> (i32, i32) {
    %c0_i32 = arith.constant 0 : i32
    %c0_i32_0 = arith.constant 0 : i32
    %c0_i32_1 = arith.constant 0 : i32
    return %c0_i32, %c0_i32_0 : i32, i32
  }
  func.func @transform_3(%arg0: i32) -> (i32, i32) {
    %c0_i32 = arith.constant 0 : i32
    %c0_i32_0 = arith.constant 0 : i32
    %c0_i32_1 = arith.constant 0 : i32
    return %c0_i32, %c0_i32_0 : i32, i32
  }
  func.func @transform_4(%arg0: i32) -> (i32, i32) {
    %c0_i32 = arith.constant 0 : i32
    %c0_i32_0 = arith.constant 0 : i32
    %c0_i32_1 = arith.constant 0 : i32
    return %c0_i32, %c0_i32_0 : i32, i32
  }
  func.func @transform_5(%arg0: i32) -> (i32, i32) {
    %c0_i32 = arith.constant 0 : i32
    %c0_i32_0 = arith.constant 0 : i32
    %c0_i32_1 = arith.constant 0 : i32
    return %c0_i32, %c0_i32_0 : i32, i32
  }
  func.func @transform_6(%arg0: i32) -> (i32, i32) {
    %c0_i32 = arith.constant 0 : i32
    %c0_i32_0 = arith.constant 0 : i32
    %c0_i32_1 = arith.constant 0 : i32
    return %c0_i32, %c0_i32_0 : i32, i32
  }
  func.func @transform_7(%arg0: i32) -> (i32, i32, i32, i32) {
    %c0_i32 = arith.constant 0 : i32
    %c0_i32_0 = arith.constant 0 : i32
    %c0_i32_1 = arith.constant 0 : i32
    %c0_i32_2 = arith.constant 0 : i32
    return %arg0, %c0_i32, %c0_i32_0, %c0_i32_1 : i32, i32, i32, i32
  }
}

</mosaic_0001>

<llo_original>
// kernel: down_forward.1
$region0: #{down_forward.1}
  #allocation0 [shape = 'u32[]', space=smem, size = 0x4, offset = 0x4, fixed_abs, tag = 'smem constant byte address 0x4 - core index']
  #allocation1 [shape = 'u32[144,128]{1,0:T(1,128)}', space=vmem, size = 0x12000, scoped, tag = 'internal scratch']
  #allocation2 [shape = 'f32[10,10,128]{2,1,0:T(8,128)}', space=vmem, size = 0x14000, scoped, tag = 'scratch operand']
  #allocation3 [shape = 'f32[10,10,128]{2,1,0:T(8,128)}', space=vmem, size = 0x14000, scoped, tag = 'scratch operand']
  %s0 = inlined_call_operand.vmem [shape: f32[2,8,2,8,256], index: 0, kind: input, shape index: {}]
  %s1 = inlined_call_operand.vmem [shape: f32[1152,128], index: 1, kind: input, shape index: {}]
  %s2 = inlined_call_operand.vmem [shape: f32[1,128], index: 2, kind: input, shape index: {}]
  %s3 = inlined_call_operand.vmem [shape: f32[1,128], index: 3, kind: input, shape index: {}]
  %s4 = inlined_call_operand.vmem [shape: f32[1152,128], index: 4, kind: input, shape index: {}]
  %s5 = inlined_call_operand.vmem [shape: f32[1,128], index: 5, kind: input, shape index: {}]
  %s6 = inlined_call_operand.vmem [shape: f32[1,128], index: 6, kind: input, shape index: {}]
  %s7 = inlined_call_operand.vmem [shape: f32[2,8,8,128], index: 7, kind: output, shape index: {}]
  %s8 = sld [smem:[#allocation0]]
  $region61: #{down_forward.1} parent=0
    _
  %s10 = ssub.s32 1, %s8
  %s11 = scalar_select 0, %s10, %s8
  loop: start=0, step=1, limit=4
  $region2: #{down_forward.1} parent=0 // loop_pre_header
    _
  $region3: #{down_forward.1} parent=0 // loop_header
    %s13 = sphi 0, %s17
    %p14 = scmp.ge.s32.totalorder %s13, 4
    %s23 = sphi 0, %s25
    %s26 = sphi 0, %s23
    %s27 = sphi 0, %s26
    %s43 = sphi 0, %s27
    %s47 = sphi 0, %s47
    %s49 = sphi 0, %s47
    %s50 = sphi 0, %s49
    %s64 = sphi 0, %s50
    %s68 = sphi 0, %s68
    %s70 = sphi 0, %s68
    %s71 = sphi 0, %s70
    %s85 = sphi 0, %s71
    %s89 = sphi 0, %s89
    %s91 = sphi 0, %s89
    %s92 = sphi 0, %s91
    %s106 = sphi 0, %s92
    %s110 = sphi 0, %s110
    %s112 = sphi 0, %s110
    %s113 = sphi 0, %s112
    %s127 = sphi 0, %s113
    %s131 = sphi 0, %s131
    %s133 = sphi 0, %s131
    %s134 = sphi 0, %s133
    %s148 = sphi 0, %s134
    %s152 = sphi 0, %s152
    %s154 = sphi 0, %s152
    %s155 = sphi 0, %s154
    %s169 = sphi 0, %s155
    %s175 = sphi 0, %s177
    %s178 = sphi 0, %s175
    %s179 = sphi 0, %s178
    %s195 = sphi 0, %s179
  $region4: #{down_forward.1} parent=0 // loop_header_branch
    %16 = sbr.rel (%p14) target = $region8
  $region5: #{down_forward.1} parent=0 // loop_body
    %s18 = ssub.s32 %s13, 1
    %s19 = ssub.s32 %s13, 2
    %s20 = sadd.s32 %s13, 1
    %s21 = ssub.s32 %s13, %s20
    %p22 = scmp.eq.s32.totalorder %s21, 0
    %s24 = sadd.s32 %s23, 1
    %s25 = scalar_select %p22, %s23, %s24
    %p28 = pneg %p22
    %p29 = scmp.eq.s32.totalorder %s13, 1
    %p30 = por %p28, %p29
    %p31 = scmp.ne.s32.totalorder %s23, %s26
    %p32 = scmp.eq.s32.totalorder %s13, 0
    %p33 = por %p31, %p32
    %p34 = scmp.ne.s32.totalorder %s23, %s26
    %p35 = scmp.eq.s32.totalorder %s18, 1
    %p36 = por %p34, %p35
    %p37 = scmp.ne.s32.totalorder %s26, %s27
    %p38 = scmp.eq.s32.totalorder %s18, 0
    %p39 = por %p37, %p38
    %p40 = scmp.ne.s32.totalorder %s26, %s27
    %p41 = scmp.eq.s32.totalorder %s19, 1
    %p42 = por %p40, %p41
    %p44 = scmp.ne.s32.totalorder %s27, %s43
    %p45 = scmp.eq.s32.totalorder %s19, 0
    %p46 = por %p44, %p45
    %s48 = sadd.s32 %s47, 1
    %p51 = scmp.eq.s32.totalorder %s13, 1
    %p52 = scmp.ne.s32.totalorder %s47, %s49
    %p53 = scmp.eq.s32.totalorder %s13, 0
    %p54 = por %p52, %p53
    %p55 = scmp.ne.s32.totalorder %s47, %s49
    %p56 = scmp.eq.s32.totalorder %s18, 1
    %p57 = por %p55, %p56
    %p58 = scmp.ne.s32.totalorder %s49, %s50
    %p59 = scmp.eq.s32.totalorder %s18, 0
    %p60 = por %p58, %p59
    %p61 = scmp.ne.s32.totalorder %s49, %s50
    %p62 = scmp.eq.s32.totalorder %s19, 1
    %p63 = por %p61, %p62
    %p65 = scmp.ne.s32.totalorder %s50, %s64
    %p66 = scmp.eq.s32.totalorder %s19, 0
    %p67 = por %p65, %p66
    %s69 = sadd.s32 %s68, 1
    %p72 = scmp.eq.s32.totalorder %s13, 1
    %p73 = scmp.ne.s32.totalorder %s68, %s70
    %p74 = scmp.eq.s32.totalorder %s13, 0
    %p75 = por %p73, %p74
    %p76 = scmp.ne.s32.totalorder %s68, %s70
    %p77 = scmp.eq.s32.totalorder %s18, 1
    %p78 = por %p76, %p77
    %p79 = scmp.ne.s32.totalorder %s70, %s71
    %p80 = scmp.eq.s32.totalorder %s18, 0
    %p81 = por %p79, %p80
    %p82 = scmp.ne.s32.totalorder %s70, %s71
    %p83 = scmp.eq.s32.totalorder %s19, 1
    %p84 = por %p82, %p83
    %p86 = scmp.ne.s32.totalorder %s71, %s85
    %p87 = scmp.eq.s32.totalorder %s19, 0
    %p88 = por %p86, %p87
    %s90 = sadd.s32 %s89, 1
    %p93 = scmp.eq.s32.totalorder %s13, 1
    %p94 = scmp.ne.s32.totalorder %s89, %s91
    %p95 = scmp.eq.s32.totalorder %s13, 0
    %p96 = por %p94, %p95
    %p97 = scmp.ne.s32.totalorder %s89, %s91
    %p98 = scmp.eq.s32.totalorder %s18, 1
    %p99 = por %p97, %p98
    %p100 = scmp.ne.s32.totalorder %s91, %s92
    %p101 = scmp.eq.s32.totalorder %s18, 0
    %p102 = por %p100, %p101
    %p103 = scmp.ne.s32.totalorder %s91, %s92
    %p104 = scmp.eq.s32.totalorder %s19, 1
    %p105 = por %p103, %p104
    %p107 = scmp.ne.s32.totalorder %s92, %s106
    %p108 = scmp.eq.s32.totalorder %s19, 0
    %p109 = por %p107, %p108
    %s111 = sadd.s32 %s110, 1
    %p114 = scmp.eq.s32.totalorder %s13, 1
    %p115 = scmp.ne.s32.totalorder %s110, %s112
    %p116 = scmp.eq.s32.totalorder %s13, 0
    %p117 = por %p115, %p116
    %p118 = scmp.ne.s32.totalorder %s110, %s112
    %p119 = scmp.eq.s32.totalorder %s18, 1
    %p120 = por %p118, %p119
    %p121 = scmp.ne.s32.totalorder %s112, %s113
    %p122 = scmp.eq.s32.totalorder %s18, 0
    %p123 = por %p121, %p122
    %p124 = scmp.ne.s32.totalorder %s112, %s113
    %p125 = scmp.eq.s32.totalorder %s19, 1
    %p126 = por %p124, %p125
    %p128 = scmp.ne.s32.totalorder %s113, %s127
    %p129 = scmp.eq.s32.totalorder %s19, 0
    %p130 = por %p128, %p129
    %s132 = sadd.s32 %s131, 1
    %p135 = scmp.eq.s32.totalorder %s13, 1
    %p136 = scmp.ne.s32.totalorder %s131, %s133
    %p137 = scmp.eq.s32.totalorder %s13, 0
    %p138 = por %p136, %p137
    %p139 = scmp.ne.s32.totalorder %s131, %s133
    %p140 = scmp.eq.s32.totalorder %s18, 1
    %p141 = por %p139, %p140
    %p142 = scmp.ne.s32.totalorder %s133, %s134
    %p143 = scmp.eq.s32.totalorder %s18, 0
    %p144 = por %p142, %p143
    %p145 = scmp.ne.s32.totalorder %s133, %s134
    %p146 = scmp.eq.s32.totalorder %s19, 1
    %p147 = por %p145, %p146
    %p149 = scmp.ne.s32.totalorder %s134, %s148
    %p150 = scmp.eq.s32.totalorder %s19, 0
    %p151 = por %p149, %p150
    %s153 = sadd.s32 %s152, 1
    %p156 = scmp.eq.s32.totalorder %s13, 1
    %p157 = scmp.ne.s32.totalorder %s152, %s154
    %p158 = scmp.eq.s32.totalorder %s13, 0
    %p159 = por %p157, %p158
    %p160 = scmp.ne.s32.totalorder %s152, %s154
    %p161 = scmp.eq.s32.totalorder %s18, 1
    %p162 = por %p160, %p161
    %p163 = scmp.ne.s32.totalorder %s154, %s155
    %p164 = scmp.eq.s32.totalorder %s18, 0
    %p165 = por %p163, %p164
    %p166 = scmp.ne.s32.totalorder %s154, %s155
    %p167 = scmp.eq.s32.totalorder %s19, 1
    %p168 = por %p166, %p167
    %p170 = scmp.ne.s32.totalorder %s155, %s169
    %p171 = scmp.eq.s32.totalorder %s19, 0
    %p172 = por %p170, %p171
    %s173 = ssub.s32 %s13, %s20
    %p174 = scmp.eq.s32.totalorder %s173, 0
    %s176 = sadd.s32 %s175, 1
    %s177 = scalar_select %p174, %s175, %s176
    %p180 = pneg %p174
    %p181 = scmp.eq.s32.totalorder %s13, 1
    %p182 = por %p180, %p181
    %p183 = scmp.ne.s32.totalorder %s175, %s178
    %p184 = scmp.eq.s32.totalorder %s13, 0
    %p185 = por %p183, %p184
    %p186 = scmp.ne.s32.totalorder %s175, %s178
    %p187 = scmp.eq.s32.totalorder %s18, 1
    %p188 = por %p186, %p187
    %p189 = scmp.ne.s32.totalorder %s178, %s179
    %p190 = scmp.eq.s32.totalorder %s18, 0
    %p191 = por %p189, %p190
    %p192 = scmp.ne.s32.totalorder %s178, %s179
    %p193 = scmp.eq.s32.totalorder %s19, 1
    %p194 = por %p192, %p193
    %p196 = scmp.ne.s32.totalorder %s179, %s195
    %p197 = scmp.eq.s32.totalorder %s19, 0
    %p198 = por %p196, %p197
    %p199 = scmp.le.s32.totalorder 1, %s13
    %p200 = scmp.lt.s32.totalorder %s13, 3
    %p201 = pnand %p199, %p200
    %p202 = pneg %p201
    // Predicated region
    $region9: #{down_forward.1} parent=5 // pred_check
      _
    $region10: #{down_forward.1} parent=5 // pred_check_branch
      %204 = sbr.rel (%p201) target = $region12
    $region11: #{down_forward.1} parent=5 // pred_region
      %s205 = ssub.s32 %s13, 1
      // Predicated region
      $region13: #{down_forward.1} parent=11 // pred_check
        %p206 = pneg %p60
      $region14: #{down_forward.1} parent=11 // pred_check_branch
        %208 = sbr.rel (%p206) target = $region16
      $region15: #{down_forward.1} parent=11 // pred_region
        _
      $region16: #{down_forward.1} parent=11 // pred_fallthru
        _
      // Predicated region
      $region17: #{down_forward.1} parent=11 // pred_check
        %p209 = pneg %p81
      $region18: #{down_forward.1} parent=11 // pred_check_branch
        %211 = sbr.rel (%p209) target = $region20
      $region19: #{down_forward.1} parent=11 // pred_region
        _
      $region20: #{down_forward.1} parent=11 // pred_fallthru
        _
      // Predicated region
      $region21: #{down_forward.1} parent=11 // pred_check
        %p212 = pneg %p102
      $region22: #{down_forward.1} parent=11 // pred_check_branch
        %214 = sbr.rel (%p212) target = $region24
      $region23: #{down_forward.1} parent=11 // pred_region
        _
      $region24: #{down_forward.1} parent=11 // pred_fallthru
        _
      // Predicated region
      $region25: #{down_forward.1} parent=11 // pred_check
        %p215 = pneg %p123
      $region26: #{down_forward.1} parent=11 // pred_check_branch
        %217 = sbr.rel (%p215) target = $region28
      $region27: #{down_forward.1} parent=11 // pred_region
        _
      $region28: #{down_forward.1} parent=11 // pred_fallthru
        _
      // Predicated region
      $region29: #{down_forward.1} parent=11 // pred_check
        %p218 = pneg %p144
      $region30: #{down_forward.1} parent=11 // pred_check_branch
        %220 = sbr.rel (%p218) target = $region32
      $region31: #{down_forward.1} parent=11 // pred_region
        _
      $region32: #{down_forward.1} parent=11 // pred_fallthru
        _
      // Predicated region
      $region33: #{down_forward.1} parent=11 // pred_check
        %p221 = pneg %p165
      $region34: #{down_forward.1} parent=11 // pred_check_branch
        %223 = sbr.rel (%p221) target = $region36
      $region35: #{down_forward.1} parent=11 // pred_region
        _
      $region36: #{down_forward.1} parent=11 // pred_fallthru
        _
    $region12: #{down_forward.1} parent=5 // pred_fallthru
      _
    %p224 = scmp.lt.s32.totalorder %s13, 2
    // Predicated region
    $region37: #{down_forward.1} parent=5 // pred_check
      %p225 = pneg %p224
    $region38: #{down_forward.1} parent=5 // pred_check_branch
      %227 = sbr.rel (%p225) target = $region40
    $region39: #{down_forward.1} parent=5 // pred_region
      // Predicated region
      $region41: #{down_forward.1} parent=39 // pred_check
        %p228 = pneg %p33
      $region42: #{down_forward.1} parent=39 // pred_check_branch
        %230 = sbr.rel (%p228) target = $region44
      $region43: #{down_forward.1} parent=39 // pred_region
        %p231 = scmp.lt.s32.totalorder %s13, 1
        %s232 = scalar_select %p231, %s13, 1
        %s233 = smul.addr %s232, 32
        %s234 = smul.addr %s233, 8
        %s235 = scalar_lea.vmem %s0, %s234
      $region44: #{down_forward.1} parent=39 // pred_fallthru
        _
    $region40: #{down_forward.1} parent=5 // pred_fallthru
      _
    %p236 = scmp.le.s32.totalorder 1, %s13
    %p237 = scmp.lt.s32.totalorder %s13, 3
    %p238 = pnand %p236, %p237
    %p239 = pneg %p238
    // Predicated region
    $region45: #{down_forward.1} parent=5 // pred_check
      _
    $region46: #{down_forward.1} parent=5 // pred_check_branch
      %241 = sbr.rel (%p238) target = $region48
    $region47: #{down_forward.1} parent=5 // pred_region
      %s242 = ssub.s32 %s13, 1
      %p243 = scmp.lt.s32.totalorder %s18, 1
      %s244 = scalar_select %p243, %s18, 1
      %s245 = smul.addr %s244, 32
      %s246 = smul.addr %s245, 8
      %s247 = scalar_lea.vmem %s0, %s246
      %p248 = pneg %p39
      %p249 = pneg %p36
      %p250 = pneg %p60
      %p251 = pneg %p57
      %p252 = pneg %p81
      %p253 = pneg %p78
      %p254 = pneg %p102
      %p255 = pneg %p99
      %p256 = pneg %p123
      %p257 = pneg %p120
      %p258 = pneg %p144
      %p259 = pneg %p141
      %p260 = pneg %p165
      %p261 = pneg %p162
      %p262 = pneg %p191
      %p263 = pneg %p188
      %p264 = scmp.lt.s32.totalorder %s18, 1
      %s265 = scalar_select %p264, %s18, 1
      %s266 = smul.addr %s265, 8
      %s267 = smul.addr %s266, 8
      %s268 = scalar_lea.vmem %s7, %s267
      %p269 = scmp.lt.s32.totalorder %s18, 1
      %s270 = scalar_select %p269, %s18, 1
      %s271 = smul.addr %s270, 32
      %s272 = smul.addr %s271, 8
      %s273 = scalar_lea.vmem %s0, %s272
      %p274 = scmp.lt.s32.totalorder %s18, 1
      %s275 = scalar_select %p274, %s18, 1
      %s276 = smul.addr %s275, 8
      %s277 = smul.addr %s276, 8
      %s278 = scalar_lea.vmem %s7, %s277
      %v279 = vld [vmem:[%s273] sm:$0xff]
      %v280 = vld [vmem:[%s273 + $0x8] sm:$0xff]
      %v281 = vld [vmem:[%s273 + $0x20] sm:$0xff]
      %v282 = vld [vmem:[%s273 + $0x28] sm:$0xff]
      %v283 = vld [vmem:[%s273 + $0x40] sm:$0xff]
      %v284 = vld [vmem:[%s273 + $0x48] sm:$0xff]
      %v285 = vld [vmem:[%s273 + $0x60] sm:$0xff]
      %v286 = vld [vmem:[%s273 + $0x68] sm:$0xff]
      %v287 = vld [vmem:[%s273 + $0x80] sm:$0xff]
      %v288 = vld [vmem:[%s273 + $0x88] sm:$0xff]
      %v289 = vld [vmem:[%s273 + $0xa0] sm:$0xff]
      %v290 = vld [vmem:[%s273 + $0xa8] sm:$0xff]
      %v291 = vld [vmem:[%s273 + $0xc0] sm:$0xff]
      %v292 = vld [vmem:[%s273 + $0xc8] sm:$0xff]
      %v293 = vld [vmem:[%s273 + $0xe0] sm:$0xff]
      %v294 = vld [vmem:[%s273 + $0xe8] sm:$0xff]
      %s295 = scalar_lea.vmem %s273, 16
      %v296 = vld [vmem:[%s295] sm:$0xff]
      %v297 = vld [vmem:[%s295 + $0x8] sm:$0xff]
      %v298 = vld [vmem:[%s295 + $0x20] sm:$0xff]
      %v299 = vld [vmem:[%s295 + $0x28] sm:$0xff]
      %v300 = vld [vmem:[%s295 + $0x40] sm:$0xff]
      %v301 = vld [vmem:[%s295 + $0x48] sm:$0xff]
      %v302 = vld [vmem:[%s295 + $0x60] sm:$0xff]
      %v303 = vld [vmem:[%s295 + $0x68] sm:$0xff]
      %v304 = vld [vmem:[%s295 + $0x80] sm:$0xff]
      %v305 = vld [vmem:[%s295 + $0x88] sm:$0xff]
      %v306 = vld [vmem:[%s295 + $0xa0] sm:$0xff]
      %v307 = vld [vmem:[%s295 + $0xa8] sm:$0xff]
      %v308 = vld [vmem:[%s295 + $0xc0] sm:$0xff]
      %v309 = vld [vmem:[%s295 + $0xc8] sm:$0xff]
      %v310 = vld [vmem:[%s295 + $0xe0] sm:$0xff]
      %v311 = vld [vmem:[%s295 + $0xe8] sm:$0xff]
      %v312 = vmax.f32 %v279, %v280
      %v313 = vmax.f32 %v281, %v282
      %v314 = vmax.f32 %v283, %v284
      %v315 = vmax.f32 %v285, %v286
      %v316 = vmax.f32 %v287, %v288
      %v317 = vmax.f32 %v289, %v290
      %v318 = vmax.f32 %v291, %v292
      %v319 = vmax.f32 %v293, %v294
      %v320 = vmax.f32 %v296, %v297
      %v321 = vmax.f32 %v298, %v299
      %v322 = vmax.f32 %v300, %v301
      %v323 = vmax.f32 %v302, %v303
      %v324 = vmax.f32 %v304, %v305
      %v325 = vmax.f32 %v306, %v307
      %v326 = vmax.f32 %v308, %v309
      %v327 = vmax.f32 %v310, %v311
      %v328 = vmax.f32 %v312, %v320
      %v329 = vmax.f32 %v313, %v321
      %v330 = vmax.f32 %v314, %v322
      %v331 = vmax.f32 %v315, %v323
      %v332 = vmax.f32 %v316, %v324
      %v333 = vmax.f32 %v317, %v325
      %v334 = vmax.f32 %v318, %v326
      %v335 = vmax.f32 %v319, %v327
      %336 = vst [vmem:[#allocation2] sm:$0xff] 0.0
      %337 = vst [vmem:[#allocation2 + $0x8] sm:$0x3] 0.0
      %338 = vst [vmem:[#allocation2 + $0x10] sm:$0xff] 0.0
      %339 = vst [vmem:[#allocation2 + $0x18] sm:$0x3] 0.0
      %340 = vst [vmem:[#allocation2 + $0x20] sm:$0xff] 0.0
      %341 = vst [vmem:[#allocation2 + $0x28] sm:$0x3] 0.0
      %342 = vst [vmem:[#allocation2 + $0x30] sm:$0xff] 0.0
      %343 = vst [vmem:[#allocation2 + $0x38] sm:$0x3] 0.0
      %344 = vst [vmem:[#allocation2 + $0x40] sm:$0xff] 0.0
      %345 = vst [vmem:[#allocation2 + $0x48] sm:$0x3] 0.0
      %346 = vst [vmem:[#allocation2 + $0x50] sm:$0xff] 0.0
      %347 = vst [vmem:[#allocation2 + $0x58] sm:$0x3] 0.0
      %348 = vst [vmem:[#allocation2 + $0x60] sm:$0xff] 0.0
      %349 = vst [vmem:[#allocation2 + $0x68] sm:$0x3] 0.0
      %350 = vst [vmem:[#allocation2 + $0x70] sm:$0xff] 0.0
      %351 = vst [vmem:[#allocation2 + $0x78] sm:$0x3] 0.0
      %352 = vst [vmem:[#allocation2 + $0x80] sm:$0xff] 0.0
      %353 = vst [vmem:[#allocation2 + $0x88] sm:$0x3] 0.0
      %354 = vst [vmem:[#allocation2 + $0x90] sm:$0xff] 0.0
      %355 = vst [vmem:[#allocation2 + $0x98] sm:$0x3] 0.0
      %s356 = scalar_lea.vmem [#allocation2], 16
      %357 = vst [vmem:[%s356 + $0x1] sm:$0xff] %v328
      %358 = vst [vmem:[%s356 + $0x11] sm:$0xff] %v329
      %359 = vst [vmem:[%s356 + $0x21] sm:$0xff] %v330
      %360 = vst [vmem:[%s356 + $0x31] sm:$0xff] %v331
      %361 = vst [vmem:[%s356 + $0x41] sm:$0xff] %v332
      %362 = vst [vmem:[%s356 + $0x51] sm:$0xff] %v333
      %363 = vst [vmem:[%s356 + $0x61] sm:$0xff] %v334
      %364 = vst [vmem:[%s356 + $0x71] sm:$0xff] %v335
      %v365 = vld [vmem:[#allocation2] sm:$0xff]
      %v366 = vld [vmem:[#allocation2 + $0x10] sm:$0xff]
      %v367 = vld [vmem:[#allocation2 + $0x20] sm:$0xff]
      %v368 = vld [vmem:[#allocation2 + $0x30] sm:$0xff]
      %v369 = vld [vmem:[#allocation2 + $0x40] sm:$0xff]
      %v370 = vld [vmem:[#allocation2 + $0x50] sm:$0xff]
      %v371 = vld [vmem:[#allocation2 + $0x60] sm:$0xff]
      %v372 = vld [vmem:[#allocation2 + $0x70] sm:$0xff]
      %v373 = vld [vmem:[#allocation2 + $0x1] sm:$0xff]
      %v374 = vld [vmem:[#allocation2 + $0x11] sm:$0xff]
      %v375 = vld [vmem:[#allocation2 + $0x21] sm:$0xff]
      %v376 = vld [vmem:[#allocation2 + $0x31] sm:$0xff]
      %v377 = vld [vmem:[#allocation2 + $0x41] sm:$0xff]
      %v378 = vld [vmem:[#allocation2 + $0x51] sm:$0xff]
      %v379 = vld [vmem:[#allocation2 + $0x61] sm:$0xff]
      %v380 = vld [vmem:[#allocation2 + $0x71] sm:$0xff]
      %v381 = vld [vmem:[#allocation2 + $0x2] sm:$0xff]
      %v382 = vld [vmem:[#allocation2 + $0x12] sm:$0xff]
      %v383 = vld [vmem:[#allocation2 + $0x22] sm:$0xff]
      %v384 = vld [vmem:[#allocation2 + $0x32] sm:$0xff]
      %v385 = vld [vmem:[#allocation2 + $0x42] sm:$0xff]
      %v386 = vld [vmem:[#allocation2 + $0x52] sm:$0xff]
      %v387 = vld [vmem:[#allocation2 + $0x62] sm:$0xff]
      %v388 = vld [vmem:[#allocation2 + $0x72] sm:$0xff]
      %v389 = vld [vmem:[%s356] sm:$0xff]
      %v390 = vld [vmem:[%s356 + $0x10] sm:$0xff]
      %v391 = vld [vmem:[%s356 + $0x20] sm:$0xff]
      %v392 = vld [vmem:[%s356 + $0x30] sm:$0xff]
      %v393 = vld [vmem:[%s356 + $0x40] sm:$0xff]
      %v394 = vld [vmem:[%s356 + $0x50] sm:$0xff]
      %v395 = vld [vmem:[%s356 + $0x60] sm:$0xff]
      %v396 = vld [vmem:[%s356 + $0x70] sm:$0xff]
      %v397 = vld [vmem:[%s356 + $0x1] sm:$0xff]
      %v398 = vld [vmem:[%s356 + $0x11] sm:$0xff]
      %v399 = vld [vmem:[%s356 + $0x21] sm:$0xff]
      %v400 = vld [vmem:[%s356 + $0x31] sm:$0xff]
      %v401 = vld [vmem:[%s356 + $0x41] sm:$0xff]
      %v402 = vld [vmem:[%s356 + $0x51] sm:$0xff]
      %v403 = vld [vmem:[%s356 + $0x61] sm:$0xff]
      %v404 = vld [vmem:[%s356 + $0x71] sm:$0xff]
      %v405 = vld [vmem:[%s356 + $0x2] sm:$0xff]
      %v406 = vld [vmem:[%s356 + $0x12] sm:$0xff]
      %v407 = vld [vmem:[%s356 + $0x22] sm:$0xff]
      %v408 = vld [vmem:[%s356 + $0x32] sm:$0xff]
      %v409 = vld [vmem:[%s356 + $0x42] sm:$0xff]
      %v410 = vld [vmem:[%s356 + $0x52] sm:$0xff]
      %v411 = vld [vmem:[%s356 + $0x62] sm:$0xff]
      %v412 = vld [vmem:[%s356 + $0x72] sm:$0xff]
      %s413 = scalar_lea.vmem [#allocation2], 32
      %v414 = vld [vmem:[%s413] sm:$0xff]
      %v415 = vld [vmem:[%s413 + $0x10] sm:$0xff]
      %v416 = vld [vmem:[%s413 + $0x20] sm:$0xff]
      %v417 = vld [vmem:[%s413 + $0x30] sm:$0xff]
      %v418 = vld [vmem:[%s413 + $0x40] sm:$0xff]
      %v419 = vld [vmem:[%s413 + $0x50] sm:$0xff]
      %v420 = vld [vmem:[%s413 + $0x60] sm:$0xff]
      %v421 = vld [vmem:[%s413 + $0x70] sm:$0xff]
      %v422 = vld [vmem:[%s413 + $0x1] sm:$0xff]
      %v423 = vld [vmem:[%s413 + $0x11] sm:$0xff]
      %v424 = vld [vmem:[%s413 + $0x21] sm:$0xff]
      %v425 = vld [vmem:[%s413 + $0x31] sm:$0xff]
      %v426 = vld [vmem:[%s413 + $0x41] sm:$0xff]
      %v427 = vld [vmem:[%s413 + $0x51] sm:$0xff]
      %v428 = vld [vmem:[%s413 + $0x61] sm:$0xff]
      %v429 = vld [vmem:[%s413 + $0x71] sm:$0xff]
      %v430 = vld [vmem:[%s413 + $0x2] sm:$0xff]
      %v431 = vld [vmem:[%s413 + $0x12] sm:$0xff]
      %v432 = vld [vmem:[%s413 + $0x22] sm:$0xff]
      %v433 = vld [vmem:[%s413 + $0x32] sm:$0xff]
      %v434 = vld [vmem:[%s413 + $0x42] sm:$0xff]
      %v435 = vld [vmem:[%s413 + $0x52] sm:$0xff]
      %v436 = vld [vmem:[%s413 + $0x62] sm:$0xff]
      %v437 = vld [vmem:[%s413 + $0x72] sm:$0xff]
      %v438 = vld [vmem:[%s1] sm:$0xff]
      %v439 = vld [vmem:[%s1 + $0x8] sm:$0xff]
      %v440 = vld [vmem:[%s1 + $0x10] sm:$0xff]
      %v441 = vld [vmem:[%s1 + $0x18] sm:$0xff]
      %v442 = vld [vmem:[%s1 + $0x20] sm:$0xff]
      %v443 = vld [vmem:[%s1 + $0x28] sm:$0xff]
      %v444 = vld [vmem:[%s1 + $0x30] sm:$0xff]
      %v445 = vld [vmem:[%s1 + $0x38] sm:$0xff]
      %v446 = vld [vmem:[%s1 + $0x40] sm:$0xff]
      %v447 = vld [vmem:[%s1 + $0x48] sm:$0xff]
      %v448 = vld [vmem:[%s1 + $0x50] sm:$0xff]
      %v449 = vld [vmem:[%s1 + $0x58] sm:$0xff]
      %v450 = vld [vmem:[%s1 + $0x60] sm:$0xff]
      %v451 = vld [vmem:[%s1 + $0x68] sm:$0xff]
      %v452 = vld [vmem:[%s1 + $0x70] sm:$0xff]
      %v453 = vld [vmem:[%s1 + $0x78] sm:$0xff]
      %v454 = vld [vmem:[%s1 + $0x80] sm:$0xff]
      %v455 = vld [vmem:[%s1 + $0x88] sm:$0xff]
      %v456 = vld [vmem:[%s1 + $0x90] sm:$0xff]
      %v457 = vld [vmem:[%s1 + $0x98] sm:$0xff]
      %v458 = vld [vmem:[%s1 + $0xa0] sm:$0xff]
      %v459 = vld [vmem:[%s1 + $0xa8] sm:$0xff]
      %v460 = vld [vmem:[%s1 + $0xb0] sm:$0xff]
      %v461 = vld [vmem:[%s1 + $0xb8] sm:$0xff]
      %v462 = vld [vmem:[%s1 + $0xc0] sm:$0xff]
      %v463 = vld [vmem:[%s1 + $0xc8] sm:$0xff]
      %v464 = vld [vmem:[%s1 + $0xd0] sm:$0xff]
      %v465 = vld [vmem:[%s1 + $0xd8] sm:$0xff]
      %v466 = vld [vmem:[%s1 + $0xe0] sm:$0xff]
      %v467 = vld [vmem:[%s1 + $0xe8] sm:$0xff]
      %v468 = vld [vmem:[%s1 + $0xf0] sm:$0xff]
      %v469 = vld [vmem:[%s1 + $0xf8] sm:$0xff]
      %v470 = vld [vmem:[%s1 + $0x100] sm:$0xff]
      %v471 = vld [vmem:[%s1 + $0x108] sm:$0xff]
      %v472 = vld [vmem:[%s1 + $0x110] sm:$0xff]
      %v473 = vld [vmem:[%s1 + $0x118] sm:$0xff]
      %v474 = vld [vmem:[%s1 + $0x120] sm:$0xff]
      %v475 = vld [vmem:[%s1 + $0x128] sm:$0xff]
      %v476 = vld [vmem:[%s1 + $0x130] sm:$0xff]
      %v477 = vld [vmem:[%s1 + $0x138] sm:$0xff]
      %v478 = vld [vmem:[%s1 + $0x140] sm:$0xff]
      %v479 = vld [vmem:[%s1 + $0x148] sm:$0xff]
      %v480 = vld [vmem:[%s1 + $0x150] sm:$0xff]
      %v481 = vld [vmem:[%s1 + $0x158] sm:$0xff]
      %v482 = vld [vmem:[%s1 + $0x160] sm:$0xff]
      %v483 = vld [vmem:[%s1 + $0x168] sm:$0xff]
      %v484 = vld [vmem:[%s1 + $0x170] sm:$0xff]
      %v485 = vld [vmem:[%s1 + $0x178] sm:$0xff]
      %v486 = vld [vmem:[%s1 + $0x180] sm:$0xff]
      %v487 = vld [vmem:[%s1 + $0x188] sm:$0xff]
      %v488 = vld [vmem:[%s1 + $0x190] sm:$0xff]
      %v489 = vld [vmem:[%s1 + $0x198] sm:$0xff]
      %v490 = vld [vmem:[%s1 + $0x1a0] sm:$0xff]
      %v491 = vld [vmem:[%s1 + $0x1a8] sm:$0xff]
      %v492 = vld [vmem:[%s1 + $0x1b0] sm:$0xff]
      %v493 = vld [vmem:[%s1 + $0x1b8] sm:$0xff]
      %v494 = vld [vmem:[%s1 + $0x1c0] sm:$0xff]
      %v495 = vld [vmem:[%s1 + $0x1c8] sm:$0xff]
      %v496 = vld [vmem:[%s1 + $0x1d0] sm:$0xff]
      %v497 = vld [vmem:[%s1 + $0x1d8] sm:$0xff]
      %v498 = vld [vmem:[%s1 + $0x1e0] sm:$0xff]
      %v499 = vld [vmem:[%s1 + $0x1e8] sm:$0xff]
      %v500 = vld [vmem:[%s1 + $0x1f0] sm:$0xff]
      %v501 = vld [vmem:[%s1 + $0x1f8] sm:$0xff]
      %v502 = vld [vmem:[%s1 + $0x200] sm:$0xff]
      %v503 = vld [vmem:[%s1 + $0x208] sm:$0xff]
      %v504 = vld [vmem:[%s1 + $0x210] sm:$0xff]
      %v505 = vld [vmem:[%s1 + $0x218] sm:$0xff]
      %v506 = vld [vmem:[%s1 + $0x220] sm:$0xff]
      %v507 = vld [vmem:[%s1 + $0x228] sm:$0xff]
      %v508 = vld [vmem:[%s1 + $0x230] sm:$0xff]
      %v509 = vld [vmem:[%s1 + $0x238] sm:$0xff]
      %v510 = vld [vmem:[%s1 + $0x240] sm:$0xff]
      %v511 = vld [vmem:[%s1 + $0x248] sm:$0xff]
      %v512 = vld [vmem:[%s1 + $0x250] sm:$0xff]
      %v513 = vld [vmem:[%s1 + $0x258] sm:$0xff]
      %v514 = vld [vmem:[%s1 + $0x260] sm:$0xff]
      %v515 = vld [vmem:[%s1 + $0x268] sm:$0xff]
      %v516 = vld [vmem:[%s1 + $0x270] sm:$0xff]
      %v517 = vld [vmem:[%s1 + $0x278] sm:$0xff]
      %v518 = vld [vmem:[%s1 + $0x280] sm:$0xff]
      %v519 = vld [vmem:[%s1 + $0x288] sm:$0xff]
      %v520 = vld [vmem:[%s1 + $0x290] sm:$0xff]
      %v521 = vld [vmem:[%s1 + $0x298] sm:$0xff]
      %v522 = vld [vmem:[%s1 + $0x2a0] sm:$0xff]
      %v523 = vld [vmem:[%s1 + $0x2a8] sm:$0xff]
      %v524 = vld [vmem:[%s1 + $0x2b0] sm:$0xff]
      %v525 = vld [vmem:[%s1 + $0x2b8] sm:$0xff]
      %v526 = vld [vmem:[%s1 + $0x2c0] sm:$0xff]
      %v527 = vld [vmem:[%s1 + $0x2c8] sm:$0xff]
      %v528 = vld [vmem:[%s1 + $0x2d0] sm:$0xff]
      %v529 = vld [vmem:[%s1 + $0x2d8] sm:$0xff]
      %v530 = vld [vmem:[%s1 + $0x2e0] sm:$0xff]
      %v531 = vld [vmem:[%s1 + $0x2e8] sm:$0xff]
      %v532 = vld [vmem:[%s1 + $0x2f0] sm:$0xff]
      %v533 = vld [vmem:[%s1 + $0x2f8] sm:$0xff]
      %v534 = vld [vmem:[%s1 + $0x300] sm:$0xff]
      %v535 = vld [vmem:[%s1 + $0x308] sm:$0xff]
      %v536 = vld [vmem:[%s1 + $0x310] sm:$0xff]
      %v537 = vld [vmem:[%s1 + $0x318] sm:$0xff]
      %v538 = vld [vmem:[%s1 + $0x320] sm:$0xff]
      %v539 = vld [vmem:[%s1 + $0x328] sm:$0xff]
      %v540 = vld [vmem:[%s1 + $0x330] sm:$0xff]
      %v541 = vld [vmem:[%s1 + $0x338] sm:$0xff]
      %v542 = vld [vmem:[%s1 + $0x340] sm:$0xff]
      %v543 = vld [vmem:[%s1 + $0x348] sm:$0xff]
      %v544 = vld [vmem:[%s1 + $0x350] sm:$0xff]
      %v545 = vld [vmem:[%s1 + $0x358] sm:$0xff]
      %v546 = vld [vmem:[%s1 + $0x360] sm:$0xff]
      %v547 = vld [vmem:[%s1 + $0x368] sm:$0xff]
      %v548 = vld [vmem:[%s1 + $0x370] sm:$0xff]
      %v549 = vld [vmem:[%s1 + $0x378] sm:$0xff]
      %v550 = vld [vmem:[%s1 + $0x380] sm:$0xff]
      %v551 = vld [vmem:[%s1 + $0x388] sm:$0xff]
      %v552 = vld [vmem:[%s1 + $0x390] sm:$0xff]
      %v553 = vld [vmem:[%s1 + $0x398] sm:$0xff]
      %v554 = vld [vmem:[%s1 + $0x3a0] sm:$0xff]
      %v555 = vld [vmem:[%s1 + $0x3a8] sm:$0xff]
      %v556 = vld [vmem:[%s1 + $0x3b0] sm:$0xff]
      %v557 = vld [vmem:[%s1 + $0x3b8] sm:$0xff]
      %v558 = vld [vmem:[%s1 + $0x3c0] sm:$0xff]
      %v559 = vld [vmem:[%s1 + $0x3c8] sm:$0xff]
      %v560 = vld [vmem:[%s1 + $0x3d0] sm:$0xff]
      %v561 = vld [vmem:[%s1 + $0x3d8] sm:$0xff]
      %v562 = vld [vmem:[%s1 + $0x3e0] sm:$0xff]
      %v563 = vld [vmem:[%s1 + $0x3e8] sm:$0xff]
      %v564 = vld [vmem:[%s1 + $0x3f0] sm:$0xff]
      %v565 = vld [vmem:[%s1 + $0x3f8] sm:$0xff]
      %v566 = vld [vmem:[%s1 + $0x400] sm:$0xff]
      %v567 = vld [vmem:[%s1 + $0x408] sm:$0xff]
      %v568 = vld [vmem:[%s1 + $0x410] sm:$0xff]
      %v569 = vld [vmem:[%s1 + $0x418] sm:$0xff]
      %v570 = vld [vmem:[%s1 + $0x420] sm:$0xff]
      %v571 = vld [vmem:[%s1 + $0x428] sm:$0xff]
      %v572 = vld [vmem:[%s1 + $0x430] sm:$0xff]
      %v573 = vld [vmem:[%s1 + $0x438] sm:$0xff]
      %v574 = vld [vmem:[%s1 + $0x440] sm:$0xff]
      %v575 = vld [vmem:[%s1 + $0x448] sm:$0xff]
      %v576 = vld [vmem:[%s1 + $0x450] sm:$0xff]
      %v577 = vld [vmem:[%s1 + $0x458] sm:$0xff]
      %v578 = vld [vmem:[%s1 + $0x460] sm:$0xff]
      %v579 = vld [vmem:[%s1 + $0x468] sm:$0xff]
      %v580 = vld [vmem:[%s1 + $0x470] sm:$0xff]
      %v581 = vld [vmem:[%s1 + $0x478] sm:$0xff]
      %582 = vmatprep.subr.mxu0 0.0
      %583 = vmatpush1.msra.mxu0 %v453
      %584 = vmatprep.subr.mxu0 0.0
      %585 = vmatpush1.msra.mxu0 %v452
      %586 = vmatprep.subr.mxu0 0.0
      %587 = vmatpush1.msra.mxu0 %v451
      %588 = vmatprep.subr.mxu0 0.0
      %589 = vmatpush1.msra.mxu0 %v450
      %590 = vmatprep.subr.mxu0 0.0
      %591 = vmatpush1.msra.mxu0 %v449
      %592 = vmatprep.subr.mxu0 0.0
      %593 = vmatpush1.msra.mxu0 %v448
      %594 = vmatprep.subr.mxu0 0.0
      %595 = vmatpush1.msra.mxu0 %v447
      %596 = vmatprep.subr.mxu0 0.0
      %597 = vmatpush1.msra.mxu0 %v446
      %598 = vmatprep.subr.mxu0 0.0
      %599 = vmatpush1.msra.mxu0 %v445
      %600 = vmatprep.subr.mxu0 0.0
      %601 = vmatpush1.msra.mxu0 %v444
      %602 = vmatprep.subr.mxu0 0.0
      %603 = vmatpush1.msra.mxu0 %v443
      %604 = vmatprep.subr.mxu0 0.0
      %605 = vmatpush1.msra.mxu0 %v442
      %606 = vmatprep.subr.mxu0 0.0
      %607 = vmatpush1.msra.mxu0 %v441
      %608 = vmatprep.subr.mxu0 0.0
      %609 = vmatpush1.msra.mxu0 %v440
      %610 = vmatprep.subr.mxu0 0.0
      %611 = vmatpush1.msra.mxu0 %v439
      %612 = vmatprep.subr.mxu0 0.0
      %613 = vmatpush1.msra.mxu0 %v438
      %614 = vmatprep.subr.mxu0 0.0
      %615 = vmatpush2.msra.mxu0 %v469
      %616 = vmatprep.subr.mxu0 0.0
      %617 = vmatpush2.msra.mxu0 %v468
      %618 = vmatprep.subr.mxu0 0.0
      %619 = vmatpush2.msra.mxu0 %v467
      %620 = vmatprep.subr.mxu0 0.0
      %621 = vmatpush2.msra.mxu0 %v466
      %622 = vmatprep.subr.mxu0 0.0
      %623 = vmatpush2.msra.mxu0 %v465
      %624 = vmatprep.subr.mxu0 0.0
      %625 = vmatpush2.msra.mxu0 %v464
      %626 = vmatprep.subr.mxu0 0.0
      %627 = vmatpush2.msra.mxu0 %v463
      %628 = vmatprep.subr.mxu0 0.0
      %629 = vmatpush2.msra.mxu0 %v462
      %630 = vmatprep.subr.mxu0 0.0
      %631 = vmatpush2.msra.mxu0 %v461
      %632 = vmatprep.subr.mxu0 0.0
      %633 = vmatpush2.msra.mxu0 %v460
      %634 = vmatprep.subr.mxu0 0.0
      %635 = vmatpush2.msra.mxu0 %v459
      %636 = vmatprep.subr.mxu0 0.0
      %637 = vmatpush2.msra.mxu0 %v458
      %638 = vmatprep.subr.mxu0 0.0
      %639 = vmatpush2.msra.mxu0 %v457
      %640 = vmatprep.subr.mxu0 0.0
      %641 = vmatpush2.msra.mxu0 %v456
      %642 = vmatprep.subr.mxu0 0.0
      %643 = vmatpush2.msra.mxu0 %v455
      %644 = vmatprep.subr.mxu0 0.0
      %645 = vmatpush2.msra.mxu0 %v454
      %646 = vmatprep.mubr.f32.mxu0 %v373
      %647 = vmatmul.mubr.f32.gmra.mxu0 %v365
      %v648 = vpop.f32.mrf.mxu0
      %v649 = vadd.f32 0.0, %v648
      %v650 = vpop.f32.mrf.mxu0
      %651 = vmatprep.mubr.f32.mxu0 %v374
      %652 = vmatmul.mubr.f32.gmra.mxu0 %v366
      %v653 = vpop.f32.mrf.mxu0
      %v654 = vadd.f32 0.0, %v653
      %v655 = vpop.f32.mrf.mxu0
      %656 = vmatprep.mubr.f32.mxu0 %v375
      %657 = vmatmul.mubr.f32.gmra.mxu0 %v367
      %v658 = vpop.f32.mrf.mxu0
      %v659 = vadd.f32 0.0, %v658
      %v660 = vpop.f32.mrf.mxu0
      %661 = vmatprep.mubr.f32.mxu0 %v376
      %662 = vmatmul.mubr.f32.gmra.mxu0 %v368
      %v663 = vpop.f32.mrf.mxu0
      %v664 = vadd.f32 0.0, %v663
      %v665 = vpop.f32.mrf.mxu0
      %666 = vmatprep.mubr.f32.mxu0 %v377
      %667 = vmatmul.mubr.f32.gmra.mxu0 %v369
      %v668 = vpop.f32.mrf.mxu0
      %v669 = vadd.f32 0.0, %v668
      %v670 = vpop.f32.mrf.mxu0
      %671 = vmatprep.mubr.f32.mxu0 %v378
      %672 = vmatmul.mubr.f32.gmra.mxu0 %v370
      %v673 = vpop.f32.mrf.mxu0
      %v674 = vadd.f32 0.0, %v673
      %v675 = vpop.f32.mrf.mxu0
      %676 = vmatprep.mubr.f32.mxu0 %v379
      %677 = vmatmul.mubr.f32.gmra.mxu0 %v371
      %v678 = vpop.f32.mrf.mxu0
      %v679 = vadd.f32 0.0, %v678
      %v680 = vpop.f32.mrf.mxu0
      %681 = vmatprep.mubr.f32.mxu0 %v380
      %682 = vmatmul.mubr.f32.gmra.mxu0 %v372
      %v683 = vpop.f32.mrf.mxu0
      %v684 = vadd.f32 0.0, %v683
      %v685 = vpop.f32.mrf.mxu0
      %686 = vdwg.mxu0
      %687 = vmatprep.subr.mxu0 0.0
      %688 = vmatpush1.msra.mxu0 %v485
      %689 = vmatprep.subr.mxu0 0.0
      %690 = vmatpush1.msra.mxu0 %v484
      %691 = vmatprep.subr.mxu0 0.0
      %692 = vmatpush1.msra.mxu0 %v483
      %693 = vmatprep.subr.mxu0 0.0
      %694 = vmatpush1.msra.mxu0 %v482
      %695 = vmatprep.subr.mxu0 0.0
      %696 = vmatpush1.msra.mxu0 %v481
      %697 = vmatprep.subr.mxu0 0.0
      %698 = vmatpush1.msra.mxu0 %v480
      %699 = vmatprep.subr.mxu0 0.0
      %700 = vmatpush1.msra.mxu0 %v479
      %701 = vmatprep.subr.mxu0 0.0
      %702 = vmatpush1.msra.mxu0 %v478
      %703 = vmatprep.subr.mxu0 0.0
      %704 = vmatpush1.msra.mxu0 %v477
      %705 = vmatprep.subr.mxu0 0.0
      %706 = vmatpush1.msra.mxu0 %v476
      %707 = vmatprep.subr.mxu0 0.0
      %708 = vmatpush1.msra.mxu0 %v475
      %709 = vmatprep.subr.mxu0 0.0
      %710 = vmatpush1.msra.mxu0 %v474
      %711 = vmatprep.subr.mxu0 0.0
      %712 = vmatpush1.msra.mxu0 %v473
      %713 = vmatprep.subr.mxu0 0.0
      %714 = vmatpush1.msra.mxu0 %v472
      %715 = vmatprep.subr.mxu0 0.0
      %716 = vmatpush1.msra.mxu0 %v471
      %717 = vmatprep.subr.mxu0 0.0
      %718 = vmatpush1.msra.mxu0 %v470
      %719 = vmatprep.subr.mxu0 0.0
      %720 = vmatpush2.msra.mxu0 %v501
      %721 = vmatprep.subr.mxu0 0.0
      %722 = vmatpush2.msra.mxu0 %v500
      %723 = vmatprep.subr.mxu0 0.0
      %724 = vmatpush2.msra.mxu0 %v499
      %725 = vmatprep.subr.mxu0 0.0
      %726 = vmatpush2.msra.mxu0 %v498
      %727 = vmatprep.subr.mxu0 0.0
      %728 = vmatpush2.msra.mxu0 %v497
      %729 = vmatprep.subr.mxu0 0.0
      %730 = vmatpush2.msra.mxu0 %v496
      %731 = vmatprep.subr.mxu0 0.0
      %732 = vmatpush2.msra.mxu0 %v495
      %733 = vmatprep.subr.mxu0 0.0
      %734 = vmatpush2.msra.mxu0 %v494
      %735 = vmatprep.subr.mxu0 0.0
      %736 = vmatpush2.msra.mxu0 %v493
      %737 = vmatprep.subr.mxu0 0.0
      %738 = vmatpush2.msra.mxu0 %v492
      %739 = vmatprep.subr.mxu0 0.0
      %740 = vmatpush2.msra.mxu0 %v491
      %741 = vmatprep.subr.mxu0 0.0
      %742 = vmatpush2.msra.mxu0 %v490
      %743 = vmatprep.subr.mxu0 0.0
      %744 = vmatpush2.msra.mxu0 %v489
      %745 = vmatprep.subr.mxu0 0.0
      %746 = vmatpush2.msra.mxu0 %v488
      %747 = vmatprep.subr.mxu0 0.0
      %748 = vmatpush2.msra.mxu0 %v487
      %749 = vmatprep.subr.mxu0 0.0
      %750 = vmatpush2.msra.mxu0 %v486
      %751 = vmatprep.mubr.f32.mxu0 %v389
      %752 = vmatmul.mubr.f32.gmra.mxu0 %v381
      %v753 = vpop.f32.mrf.mxu0
      %v754 = vadd.f32 %v649, %v753
      %v755 = vpop.f32.mrf.mxu0
      %756 = vmatprep.mubr.f32.mxu0 %v390
      %757 = vmatmul.mubr.f32.gmra.mxu0 %v382
      %v758 = vpop.f32.mrf.mxu0
      %v759 = vadd.f32 %v654, %v758
      %v760 = vpop.f32.mrf.mxu0
      %761 = vmatprep.mubr.f32.mxu0 %v391
      %762 = vmatmul.mubr.f32.gmra.mxu0 %v383
      %v763 = vpop.f32.mrf.mxu0
      %v764 = vadd.f32 %v659, %v763
      %v765 = vpop.f32.mrf.mxu0
      %766 = vmatprep.mubr.f32.mxu0 %v392
      %767 = vmatmul.mubr.f32.gmra.mxu0 %v384
      %v768 = vpop.f32.mrf.mxu0
      %v769 = vadd.f32 %v664, %v768
      %v770 = vpop.f32.mrf.mxu0
      %771 = vmatprep.mubr.f32.mxu0 %v393
      %772 = vmatmul.mubr.f32.gmra.mxu0 %v385
      %v773 = vpop.f32.mrf.mxu0
      %v774 = vadd.f32 %v669, %v773
      %v775 = vpop.f32.mrf.mxu0
      %776 = vmatprep.mubr.f32.mxu0 %v394
      %777 = vmatmul.mubr.f32.gmra.mxu0 %v386
      %v778 = vpop.f32.mrf.mxu0
      %v779 = vadd.f32 %v674, %v778
      %v780 = vpop.f32.mrf.mxu0
      %781 = vmatprep.mubr.f32.mxu0 %v395
      %782 = vmatmul.mubr.f32.gmra.mxu0 %v387
      %v783 = vpop.f32.mrf.mxu0
      %v784 = vadd.f32 %v679, %v783
      %v785 = vpop.f32.mrf.mxu0
      %786 = vmatprep.mubr.f32.mxu0 %v396
      %787 = vmatmul.mubr.f32.gmra.mxu0 %v388
      %v788 = vpop.f32.mrf.mxu0
      %v789 = vadd.f32 %v684, %v788
      %v790 = vpop.f32.mrf.mxu0
      %791 = vdwg.mxu0
      %792 = vmatprep.subr.mxu0 0.0
      %793 = vmatpush1.msra.mxu0 %v517
      %794 = vmatprep.subr.mxu0 0.0
      %795 = vmatpush1.msra.mxu0 %v516
      %796 = vmatprep.subr.mxu0 0.0
      %797 = vmatpush1.msra.mxu0 %v515
      %798 = vmatprep.subr.mxu0 0.0
      %799 = vmatpush1.msra.mxu0 %v514
      %800 = vmatprep.subr.mxu0 0.0
      %801 = vmatpush1.msra.mxu0 %v513
      %802 = vmatprep.subr.mxu0 0.0
      %803 = vmatpush1.msra.mxu0 %v512
      %804 = vmatprep.subr.mxu0 0.0
      %805 = vmatpush1.msra.mxu0 %v511
      %806 = vmatprep.subr.mxu0 0.0
      %807 = vmatpush1.msra.mxu0 %v510
      %808 = vmatprep.subr.mxu0 0.0
      %809 = vmatpush1.msra.mxu0 %v509
      %810 = vmatprep.subr.mxu0 0.0
      %811 = vmatpush1.msra.mxu0 %v508
      %812 = vmatprep.subr.mxu0 0.0
      %813 = vmatpush1.msra.mxu0 %v507
      %814 = vmatprep.subr.mxu0 0.0
      %815 = vmatpush1.msra.mxu0 %v506
      %816 = vmatprep.subr.mxu0 0.0
      %817 = vmatpush1.msra.mxu0 %v505
      %818 = vmatprep.subr.mxu0 0.0
      %819 = vmatpush1.msra.mxu0 %v504
      %820 = vmatprep.subr.mxu0 0.0
      %821 = vmatpush1.msra.mxu0 %v503
      %822 = vmatprep.subr.mxu0 0.0
      %823 = vmatpush1.msra.mxu0 %v502
      %824 = vmatprep.subr.mxu0 0.0
      %825 = vmatpush2.msra.mxu0 %v533
      %826 = vmatprep.subr.mxu0 0.0
      %827 = vmatpush2.msra.mxu0 %v532
      %828 = vmatprep.subr.mxu0 0.0
      %829 = vmatpush2.msra.mxu0 %v531
      %830 = vmatprep.subr.mxu0 0.0
      %831 = vmatpush2.msra.mxu0 %v530
      %832 = vmatprep.subr.mxu0 0.0
      %833 = vmatpush2.msra.mxu0 %v529
      %834 = vmatprep.subr.mxu0 0.0
      %835 = vmatpush2.msra.mxu0 %v528
      %836 = vmatprep.subr.mxu0 0.0
      %837 = vmatpush2.msra.mxu0 %v527
      %838 = vmatprep.subr.mxu0 0.0
      %839 = vmatpush2.msra.mxu0 %v526
      %840 = vmatprep.subr.mxu0 0.0
      %841 = vmatpush2.msra.mxu0 %v525
      %842 = vmatprep.subr.mxu0 0.0
      %843 = vmatpush2.msra.mxu0 %v524
      %844 = vmatprep.subr.mxu0 0.0
      %845 = vmatpush2.msra.mxu0 %v523
      %846 = vmatprep.subr.mxu0 0.0
      %847 = vmatpush2.msra.mxu0 %v522
      %848 = vmatprep.subr.mxu0 0.0
      %849 = vmatpush2.msra.mxu0 %v521
      %850 = vmatprep.subr.mxu0 0.0
      %851 = vmatpush2.msra.mxu0 %v520
      %852 = vmatprep.subr.mxu0 0.0
      %853 = vmatpush2.msra.mxu0 %v519
      %854 = vmatprep.subr.mxu0 0.0
      %855 = vmatpush2.msra.mxu0 %v518
      %856 = vmatprep.mubr.f32.mxu0 %v405
      %857 = vmatmul.mubr.f32.gmra.mxu0 %v397
      %v858 = vpop.f32.mrf.mxu0
      %v859 = vadd.f32 %v754, %v858
      %v860 = vpop.f32.mrf.mxu0
      %861 = vmatprep.mubr.f32.mxu0 %v406
      %862 = vmatmul.mubr.f32.gmra.mxu0 %v398
      %v863 = vpop.f32.mrf.mxu0
      %v864 = vadd.f32 %v759, %v863
      %v865 = vpop.f32.mrf.mxu0
      %866 = vmatprep.mubr.f32.mxu0 %v407
      %867 = vmatmul.mubr.f32.gmra.mxu0 %v399
      %v868 = vpop.f32.mrf.mxu0
      %v869 = vadd.f32 %v764, %v868
      %v870 = vpop.f32.mrf.mxu0
      %871 = vmatprep.mubr.f32.mxu0 %v408
      %872 = vmatmul.mubr.f32.gmra.mxu0 %v400
      %v873 = vpop.f32.mrf.mxu0
      %v874 = vadd.f32 %v769, %v873
      %v875 = vpop.f32.mrf.mxu0
      %876 = vmatprep.mubr.f32.mxu0 %v409
      %877 = vmatmul.mubr.f32.gmra.mxu0 %v401
      %v878 = vpop.f32.mrf.mxu0
      %v879 = vadd.f32 %v774, %v878
      %v880 = vpop.f32.mrf.mxu0
      %881 = vmatprep.mubr.f32.mxu0 %v410
      %882 = vmatmul.mubr.f32.gmra.mxu0 %v402
      %v883 = vpop.f32.mrf.mxu0
      %v884 = vadd.f32 %v779, %v883
      %v885 = vpop.f32.mrf.mxu0
      %886 = vmatprep.mubr.f32.mxu0 %v411
      %887 = vmatmul.mubr.f32.gmra.mxu0 %v403
      %v888 = vpop.f32.mrf.mxu0
      %v889 = vadd.f32 %v784, %v888
      %v890 = vpop.f32.mrf.mxu0
      %891 = vmatprep.mubr.f32.mxu0 %v412
      %892 = vmatmul.mubr.f32.gmra.mxu0 %v404
      %v893 = vpop.f32.mrf.mxu0
      %v894 = vadd.f32 %v789, %v893
      %v895 = vpop.f32.mrf.mxu0
      %896 = vdwg.mxu0
      %897 = vmatprep.subr.mxu0 0.0
      %898 = vmatpush1.msra.mxu0 %v549
      %899 = vmatprep.subr.mxu0 0.0
      %900 = vmatpush1.msra.mxu0 %v548
      %901 = vmatprep.subr.mxu0 0.0
      %902 = vmatpush1.msra.mxu0 %v547
      %903 = vmatprep.subr.mxu0 0.0
      %904 = vmatpush1.msra.mxu0 %v546
      %905 = vmatprep.subr.mxu0 0.0
      %906 = vmatpush1.msra.mxu0 %v545
      %907 = vmatprep.subr.mxu0 0.0
      %908 = vmatpush1.msra.mxu0 %v544
      %909 = vmatprep.subr.mxu0 0.0
      %910 = vmatpush1.msra.mxu0 %v543
      %911 = vmatprep.subr.mxu0 0.0
      %912 = vmatpush1.msra.mxu0 %v542
      %913 = vmatprep.subr.mxu0 0.0
      %914 = vmatpush1.msra.mxu0 %v541
      %915 = vmatprep.subr.mxu0 0.0
      %916 = vmatpush1.msra.mxu0 %v540
      %917 = vmatprep.subr.mxu0 0.0
      %918 = vmatpush1.msra.mxu0 %v539
      %919 = vmatprep.subr.mxu0 0.0
      %920 = vmatpush1.msra.mxu0 %v538
      %921 = vmatprep.subr.mxu0 0.0
      %922 = vmatpush1.msra.mxu0 %v537
      %923 = vmatprep.subr.mxu0 0.0
      %924 = vmatpush1.msra.mxu0 %v536
      %925 = vmatprep.subr.mxu0 0.0
      %926 = vmatpush1.msra.mxu0 %v535
      %927 = vmatprep.subr.mxu0 0.0
      %928 = vmatpush1.msra.mxu0 %v534
      %929 = vmatprep.subr.mxu0 0.0
      %930 = vmatpush2.msra.mxu0 %v565
      %931 = vmatprep.subr.mxu0 0.0
      %932 = vmatpush2.msra.mxu0 %v564
      %933 = vmatprep.subr.mxu0 0.0
      %934 = vmatpush2.msra.mxu0 %v563
      %935 = vmatprep.subr.mxu0 0.0
      %936 = vmatpush2.msra.mxu0 %v562
      %937 = vmatprep.subr.mxu0 0.0
      %938 = vmatpush2.msra.mxu0 %v561
      %939 = vmatprep.subr.mxu0 0.0
      %940 = vmatpush2.msra.mxu0 %v560
      %941 = vmatprep.subr.mxu0 0.0
      %942 = vmatpush2.msra.mxu0 %v559
      %943 = vmatprep.subr.mxu0 0.0
      %944 = vmatpush2.msra.mxu0 %v558
      %945 = vmatprep.subr.mxu0 0.0
      %946 = vmatpush2.msra.mxu0 %v557
      %947 = vmatprep.subr.mxu0 0.0
      %948 = vmatpush2.msra.mxu0 %v556
      %949 = vmatprep.subr.mxu0 0.0
      %950 = vmatpush2.msra.mxu0 %v555
      %951 = vmatprep.subr.mxu0 0.0
      %952 = vmatpush2.msra.mxu0 %v554
      %953 = vmatprep.subr.mxu0 0.0
      %954 = vmatpush2.msra.mxu0 %v553
      %955 = vmatprep.subr.mxu0 0.0
      %956 = vmatpush2.msra.mxu0 %v552
      %957 = vmatprep.subr.mxu0 0.0
      %958 = vmatpush2.msra.mxu0 %v551
      %959 = vmatprep.subr.mxu0 0.0
      %960 = vmatpush2.msra.mxu0 %v550
      %961 = vmatprep.mubr.f32.mxu0 %v422
      %962 = vmatmul.mubr.f32.gmra.mxu0 %v414
      %v963 = vpop.f32.mrf.mxu0
      %v964 = vadd.f32 %v859, %v963
      %v965 = vpop.f32.mrf.mxu0
      %966 = vmatprep.mubr.f32.mxu0 %v423
      %967 = vmatmul.mubr.f32.gmra.mxu0 %v415
      %v968 = vpop.f32.mrf.mxu0
      %v969 = vadd.f32 %v864, %v968
      %v970 = vpop.f32.mrf.mxu0
      %971 = vmatprep.mubr.f32.mxu0 %v424
      %972 = vmatmul.mubr.f32.gmra.mxu0 %v416
      %v973 = vpop.f32.mrf.mxu0
      %v974 = vadd.f32 %v869, %v973
      %v975 = vpop.f32.mrf.mxu0
      %976 = vmatprep.mubr.f32.mxu0 %v425
      %977 = vmatmul.mubr.f32.gmra.mxu0 %v417
      %v978 = vpop.f32.mrf.mxu0
      %v979 = vadd.f32 %v874, %v978
      %v980 = vpop.f32.mrf.mxu0
      %981 = vmatprep.mubr.f32.mxu0 %v426
      %982 = vmatmul.mubr.f32.gmra.mxu0 %v418
      %v983 = vpop.f32.mrf.mxu0
      %v984 = vadd.f32 %v879, %v983
      %v985 = vpop.f32.mrf.mxu0
      %986 = vmatprep.mubr.f32.mxu0 %v427
      %987 = vmatmul.mubr.f32.gmra.mxu0 %v419
      %v988 = vpop.f32.mrf.mxu0
      %v989 = vadd.f32 %v884, %v988
      %v990 = vpop.f32.mrf.mxu0
      %991 = vmatprep.mubr.f32.mxu0 %v428
      %992 = vmatmul.mubr.f32.gmra.mxu0 %v420
      %v993 = vpop.f32.mrf.mxu0
      %v994 = vadd.f32 %v889, %v993
      %v995 = vpop.f32.mrf.mxu0
      %996 = vmatprep.mubr.f32.mxu0 %v429
      %997 = vmatmul.mubr.f32.gmra.mxu0 %v421
      %v998 = vpop.f32.mrf.mxu0
      %v999 = vadd.f32 %v894, %v998
      %v1000 = vpop.f32.mrf.mxu0
      %1001 = vdwg.mxu0
      %1002 = vmatprep.subr.mxu0 0.0
      %1003 = vmatpush1.msra.mxu0 %v581
      %1004 = vmatprep.subr.mxu0 0.0
      %1005 = vmatpush1.msra.mxu0 %v580
      %1006 = vmatprep.subr.mxu0 0.0
      %1007 = vmatpush1.msra.mxu0 %v579
      %1008 = vmatprep.subr.mxu0 0.0
      %1009 = vmatpush1.msra.mxu0 %v578
      %1010 = vmatprep.subr.mxu0 0.0
      %1011 = vmatpush1.msra.mxu0 %v577
      %1012 = vmatprep.subr.mxu0 0.0
      %1013 = vmatpush1.msra.mxu0 %v576
      %1014 = vmatprep.subr.mxu0 0.0
      %1015 = vmatpush1.msra.mxu0 %v575
      %1016 = vmatprep.subr.mxu0 0.0
      %1017 = vmatpush1.msra.mxu0 %v574
      %1018 = vmatprep.subr.mxu0 0.0
      %1019 = vmatpush1.msra.mxu0 %v573
      %1020 = vmatprep.subr.mxu0 0.0
      %1021 = vmatpush1.msra.mxu0 %v572
      %1022 = vmatprep.subr.mxu0 0.0
      %1023 = vmatpush1.msra.mxu0 %v571
      %1024 = vmatprep.subr.mxu0 0.0
      %1025 = vmatpush1.msra.mxu0 %v570
      %1026 = vmatprep.subr.mxu0 0.0
      %1027 = vmatpush1.msra.mxu0 %v569
      %1028 = vmatprep.subr.mxu0 0.0
      %1029 = vmatpush1.msra.mxu0 %v568
      %1030 = vmatprep.subr.mxu0 0.0
      %1031 = vmatpush1.msra.mxu0 %v567
      %1032 = vmatprep.subr.mxu0 0.0
      %1033 = vmatpush1.msra.mxu0 %v566
      %1034 = vmatprep.subr.mxu0 0.0
      %1035 = vmatpush2.msra.mxu0 0.0
      %1036 = vmatprep.subr.mxu0 0.0
      %1037 = vmatpush2.msra.mxu0 0.0
      %1038 = vmatprep.subr.mxu0 0.0
      %1039 = vmatpush2.msra.mxu0 0.0
      %1040 = vmatprep.subr.mxu0 0.0
      %1041 = vmatpush2.msra.mxu0 0.0
      %1042 = vmatprep.subr.mxu0 0.0
      %1043 = vmatpush2.msra.mxu0 0.0
      %1044 = vmatprep.subr.mxu0 0.0
      %1045 = vmatpush2.msra.mxu0 0.0
      %1046 = vmatprep.subr.mxu0 0.0
      %1047 = vmatpush2.msra.mxu0 0.0
      %1048 = vmatprep.subr.mxu0 0.0
      %1049 = vmatpush2.msra.mxu0 0.0
      %1050 = vmatprep.subr.mxu0 0.0
      %1051 = vmatpush2.msra.mxu0 0.0
      %1052 = vmatprep.subr.mxu0 0.0
      %1053 = vmatpush2.msra.mxu0 0.0
      %1054 = vmatprep.subr.mxu0 0.0
      %1055 = vmatpush2.msra.mxu0 0.0
      %1056 = vmatprep.subr.mxu0 0.0
      %1057 = vmatpush2.msra.mxu0 0.0
      %1058 = vmatprep.subr.mxu0 0.0
      %1059 = vmatpush2.msra.mxu0 0.0
      %1060 = vmatprep.subr.mxu0 0.0
      %1061 = vmatpush2.msra.mxu0 0.0
      %1062 = vmatprep.subr.mxu0 0.0
      %1063 = vmatpush2.msra.mxu0 0.0
      %1064 = vmatprep.subr.mxu0 0.0
      %1065 = vmatpush2.msra.mxu0 0.0
      %1066 = vmatprep.mubr.f32.mxu0 0.0
      %1067 = vmatmul.mubr.f32.gmra.mxu0 %v430
      %v1068 = vpop.f32.mrf.mxu0
      %v1069 = vadd.f32 %v964, %v1068
      %v1070 = vpop.f32.mrf.mxu0
      %1071 = vmatprep.mubr.f32.mxu0 0.0
      %1072 = vmatmul.mubr.f32.gmra.mxu0 %v431
      %v1073 = vpop.f32.mrf.mxu0
      %v1074 = vadd.f32 %v969, %v1073
      %v1075 = vpop.f32.mrf.mxu0
      %1076 = vmatprep.mubr.f32.mxu0 0.0
      %1077 = vmatmul.mubr.f32.gmra.mxu0 %v432
      %v1078 = vpop.f32.mrf.mxu0
      %v1079 = vadd.f32 %v974, %v1078
      %v1080 = vpop.f32.mrf.mxu0
      %1081 = vmatprep.mubr.f32.mxu0 0.0
      %1082 = vmatmul.mubr.f32.gmra.mxu0 %v433
      %v1083 = vpop.f32.mrf.mxu0
      %v1084 = vadd.f32 %v979, %v1083
      %v1085 = vpop.f32.mrf.mxu0
      %1086 = vmatprep.mubr.f32.mxu0 0.0
      %1087 = vmatmul.mubr.f32.gmra.mxu0 %v434
      %v1088 = vpop.f32.mrf.mxu0
      %v1089 = vadd.f32 %v984, %v1088
      %v1090 = vpop.f32.mrf.mxu0
      %1091 = vmatprep.mubr.f32.mxu0 0.0
      %1092 = vmatmul.mubr.f32.gmra.mxu0 %v435
      %v1093 = vpop.f32.mrf.mxu0
      %v1094 = vadd.f32 %v989, %v1093
      %v1095 = vpop.f32.mrf.mxu0
      %1096 = vmatprep.mubr.f32.mxu0 0.0
      %1097 = vmatmul.mubr.f32.gmra.mxu0 %v436
      %v1098 = vpop.f32.mrf.mxu0
      %v1099 = vadd.f32 %v994, %v1098
      %v1100 = vpop.f32.mrf.mxu0
      %1101 = vmatprep.mubr.f32.mxu0 0.0
      %1102 = vmatmul.mubr.f32.gmra.mxu0 %v437
      %v1103 = vpop.f32.mrf.mxu0
      %v1104 = vadd.f32 %v999, %v1103
      %v1105 = vpop.f32.mrf.mxu0
      %1106 = vdwg.mxu0
      %v1107 = vld [vmem:[%s2] sm:$0x1]
      %v1109 = vlaneseq
      %v1110 = vshrl.u32 %v1109, 7
      %v1111 = vsub.s32 0, %v1110
      %v1112 = vrot.slane %v1107, %v1111
      %v1114 = vmul.f32 %v1069, %v1112
      %v1115 = vmul.f32 %v1074, %v1112
      %v1116 = vmul.f32 %v1079, %v1112
      %v1117 = vmul.f32 %v1084, %v1112
      %v1118 = vmul.f32 %v1089, %v1112
      %v1119 = vmul.f32 %v1094, %v1112
      %v1120 = vmul.f32 %v1099, %v1112
      %v1121 = vmul.f32 %v1104, %v1112
      %v1122 = vld [vmem:[%s3] sm:$0x1]
      %v1124 = vlaneseq
      %v1125 = vshrl.u32 %v1124, 7
      %v1126 = vsub.s32 0, %v1125
      %v1127 = vrot.slane %v1122, %v1126
      %v1129 = vadd.f32 %v1114, %v1127
      %v1130 = vadd.f32 %v1115, %v1127
      %v1131 = vadd.f32 %v1116, %v1127
      %v1132 = vadd.f32 %v1117, %v1127
      %v1133 = vadd.f32 %v1118, %v1127
      %v1134 = vadd.f32 %v1119, %v1127
      %v1135 = vadd.f32 %v1120, %v1127
      %v1136 = vadd.f32 %v1121, %v1127
      %v1137 = vmax.f32 %v1129, 0.0
      %v1138 = vmax.f32 %v1130, 0.0
      %v1139 = vmax.f32 %v1131, 0.0
      %v1140 = vmax.f32 %v1132, 0.0
      %v1141 = vmax.f32 %v1133, 0.0
      %v1142 = vmax.f32 %v1134, 0.0
      %v1143 = vmax.f32 %v1135, 0.0
      %v1144 = vmax.f32 %v1136, 0.0
      %1145 = vst [vmem:[#allocation3] sm:$0xff] 0.0
      %1146 = vst [vmem:[#allocation3 + $0x8] sm:$0x3] 0.0
      %1147 = vst [vmem:[#allocation3 + $0x10] sm:$0xff] 0.0
      %1148 = vst [vmem:[#allocation3 + $0x18] sm:$0x3] 0.0
      %1149 = vst [vmem:[#allocation3 + $0x20] sm:$0xff] 0.0
      %1150 = vst [vmem:[#allocation3 + $0x28] sm:$0x3] 0.0
      %1151 = vst [vmem:[#allocation3 + $0x30] sm:$0xff] 0.0
      %1152 = vst [vmem:[#allocation3 + $0x38] sm:$0x3] 0.0
      %1153 = vst [vmem:[#allocation3 + $0x40] sm:$0xff] 0.0
      %1154 = vst [vmem:[#allocation3 + $0x48] sm:$0x3] 0.0
      %1155 = vst [vmem:[#allocation3 + $0x50] sm:$0xff] 0.0
      %1156 = vst [vmem:[#allocation3 + $0x58] sm:$0x3] 0.0
      %1157 = vst [vmem:[#allocation3 + $0x60] sm:$0xff] 0.0
      %1158 = vst [vmem:[#allocation3 + $0x68] sm:$0x3] 0.0
      %1159 = vst [vmem:[#allocation3 + $0x70] sm:$0xff] 0.0
      %1160 = vst [vmem:[#allocation3 + $0x78] sm:$0x3] 0.0
      %1161 = vst [vmem:[#allocation3 + $0x80] sm:$0xff] 0.0
      %1162 = vst [vmem:[#allocation3 + $0x88] sm:$0x3] 0.0
      %1163 = vst [vmem:[#allocation3 + $0x90] sm:$0xff] 0.0
      %1164 = vst [vmem:[#allocation3 + $0x98] sm:$0x3] 0.0
      %s1165 = scalar_lea.vmem [#allocation3], 16
      %1166 = vst [vmem:[%s1165 + $0x1] sm:$0xff] %v1137
      %1167 = vst [vmem:[%s1165 + $0x11] sm:$0xff] %v1138
      %1168 = vst [vmem:[%s1165 + $0x21] sm:$0xff] %v1139
      %1169 = vst [vmem:[%s1165 + $0x31] sm:$0xff] %v1140
      %1170 = vst [vmem:[%s1165 + $0x41] sm:$0xff] %v1141
      %1171 = vst [vmem:[%s1165 + $0x51] sm:$0xff] %v1142
      %1172 = vst [vmem:[%s1165 + $0x61] sm:$0xff] %v1143
      %1173 = vst [vmem:[%s1165 + $0x71] sm:$0xff] %v1144
      %v1174 = vld [vmem:[#allocation3] sm:$0xff]
      %v1175 = vld [vmem:[#allocation3 + $0x10] sm:$0xff]
      %v1176 = vld [vmem:[#allocation3 + $0x20] sm:$0xff]
      %v1177 = vld [vmem:[#allocation3 + $0x30] sm:$0xff]
      %v1178 = vld [vmem:[#allocation3 + $0x40] sm:$0xff]
      %v1179 = vld [vmem:[#allocation3 + $0x50] sm:$0xff]
      %v1180 = vld [vmem:[#allocation3 + $0x60] sm:$0xff]
      %v1181 = vld [vmem:[#allocation3 + $0x70] sm:$0xff]
      %v1182 = vld [vmem:[#allocation3 + $0x1] sm:$0xff]
      %v1183 = vld [vmem:[#allocation3 + $0x11] sm:$0xff]
      %v1184 = vld [vmem:[#allocation3 + $0x21] sm:$0xff]
      %v1185 = vld [vmem:[#allocation3 + $0x31] sm:$0xff]
      %v1186 = vld [vmem:[#allocation3 + $0x41] sm:$0xff]
      %v1187 = vld [vmem:[#allocation3 + $0x51] sm:$0xff]
      %v1188 = vld [vmem:[#allocation3 + $0x61] sm:$0xff]
      %v1189 = vld [vmem:[#allocation3 + $0x71] sm:$0xff]
      %v1190 = vld [vmem:[#allocation3 + $0x2] sm:$0xff]
      %v1191 = vld [vmem:[#allocation3 + $0x12] sm:$0xff]
      %v1192 = vld [vmem:[#allocation3 + $0x22] sm:$0xff]
      %v1193 = vld [vmem:[#allocation3 + $0x32] sm:$0xff]
      %v1194 = vld [vmem:[#allocation3 + $0x42] sm:$0xff]
      %v1195 = vld [vmem:[#allocation3 + $0x52] sm:$0xff]
      %v1196 = vld [vmem:[#allocation3 + $0x62] sm:$0xff]
      %v1197 = vld [vmem:[#allocation3 + $0x72] sm:$0xff]
      %v1198 = vld [vmem:[%s1165] sm:$0xff]
      %v1199 = vld [vmem:[%s1165 + $0x10] sm:$0xff]
      %v1200 = vld [vmem:[%s1165 + $0x20] sm:$0xff]
      %v1201 = vld [vmem:[%s1165 + $0x30] sm:$0xff]
      %v1202 = vld [vmem:[%s1165 + $0x40] sm:$0xff]
      %v1203 = vld [vmem:[%s1165 + $0x50] sm:$0xff]
      %v1204 = vld [vmem:[%s1165 + $0x60] sm:$0xff]
      %v1205 = vld [vmem:[%s1165 + $0x70] sm:$0xff]
      %v1206 = vld [vmem:[%s1165 + $0x1] sm:$0xff]
      %v1207 = vld [vmem:[%s1165 + $0x11] sm:$0xff]
      %v1208 = vld [vmem:[%s1165 + $0x21] sm:$0xff]
      %v1209 = vld [vmem:[%s1165 + $0x31] sm:$0xff]
      %v1210 = vld [vmem:[%s1165 + $0x41] sm:$0xff]
      %v1211 = vld [vmem:[%s1165 + $0x51] sm:$0xff]
      %v1212 = vld [vmem:[%s1165 + $0x61] sm:$0xff]
      %v1213 = vld [vmem:[%s1165 + $0x71] sm:$0xff]
      %v1214 = vld [vmem:[%s1165 + $0x2] sm:$0xff]
      %v1215 = vld [vmem:[%s1165 + $0x12] sm:$0xff]
      %v1216 = vld [vmem:[%s1165 + $0x22] sm:$0xff]
      %v1217 = vld [vmem:[%s1165 + $0x32] sm:$0xff]
      %v1218 = vld [vmem:[%s1165 + $0x42] sm:$0xff]
      %v1219 = vld [vmem:[%s1165 + $0x52] sm:$0xff]
      %v1220 = vld [vmem:[%s1165 + $0x62] sm:$0xff]
      %v1221 = vld [vmem:[%s1165 + $0x72] sm:$0xff]
      %s1222 = scalar_lea.vmem [#allocation3], 32
      %v1223 = vld [vmem:[%s1222] sm:$0xff]
      %v1224 = vld [vmem:[%s1222 + $0x10] sm:$0xff]
      %v1225 = vld [vmem:[%s1222 + $0x20] sm:$0xff]
      %v1226 = vld [vmem:[%s1222 + $0x30] sm:$0xff]
      %v1227 = vld [vmem:[%s1222 + $0x40] sm:$0xff]
      %v1228 = vld [vmem:[%s1222 + $0x50] sm:$0xff]
      %v1229 = vld [vmem:[%s1222 + $0x60] sm:$0xff]
      %v1230 = vld [vmem:[%s1222 + $0x70] sm:$0xff]
      %v1231 = vld [vmem:[%s1222 + $0x1] sm:$0xff]
      %v1232 = vld [vmem:[%s1222 + $0x11] sm:$0xff]
      %v1233 = vld [vmem:[%s1222 + $0x21] sm:$0xff]
      %v1234 = vld [vmem:[%s1222 + $0x31] sm:$0xff]
      %v1235 = vld [vmem:[%s1222 + $0x41] sm:$0xff]
      %v1236 = vld [vmem:[%s1222 + $0x51] sm:$0xff]
      %v1237 = vld [vmem:[%s1222 + $0x61] sm:$0xff]
      %v1238 = vld [vmem:[%s1222 + $0x71] sm:$0xff]
      %v1239 = vld [vmem:[%s1222 + $0x2] sm:$0xff]
      %v1240 = vld [vmem:[%s1222 + $0x12] sm:$0xff]
      %v1241 = vld [vmem:[%s1222 + $0x22] sm:$0xff]
      %v1242 = vld [vmem:[%s1222 + $0x32] sm:$0xff]
      %v1243 = vld [vmem:[%s1222 + $0x42] sm:$0xff]
      %v1244 = vld [vmem:[%s1222 + $0x52] sm:$0xff]
      %v1245 = vld [vmem:[%s1222 + $0x62] sm:$0xff]
      %v1246 = vld [vmem:[%s1222 + $0x72] sm:$0xff]
      %v1247 = vld [vmem:[%s4] sm:$0xff]
      %v1248 = vld [vmem:[%s4 + $0x8] sm:$0xff]
      %v1249 = vld [vmem:[%s4 + $0x10] sm:$0xff]
      %v1250 = vld [vmem:[%s4 + $0x18] sm:$0xff]
      %v1251 = vld [vmem:[%s4 + $0x20] sm:$0xff]
      %v1252 = vld [vmem:[%s4 + $0x28] sm:$0xff]
      %v1253 = vld [vmem:[%s4 + $0x30] sm:$0xff]
      %v1254 = vld [vmem:[%s4 + $0x38] sm:$0xff]
      %v1255 = vld [vmem:[%s4 + $0x40] sm:$0xff]
      %v1256 = vld [vmem:[%s4 + $0x48] sm:$0xff]
      %v1257 = vld [vmem:[%s4 + $0x50] sm:$0xff]
      %v1258 = vld [vmem:[%s4 + $0x58] sm:$0xff]
      %v1259 = vld [vmem:[%s4 + $0x60] sm:$0xff]
      %v1260 = vld [vmem:[%s4 + $0x68] sm:$0xff]
      %v1261 = vld [vmem:[%s4 + $0x70] sm:$0xff]
      %v1262 = vld [vmem:[%s4 + $0x78] sm:$0xff]
      %v1263 = vld [vmem:[%s4 + $0x80] sm:$0xff]
      %v1264 = vld [vmem:[%s4 + $0x88] sm:$0xff]
      %v1265 = vld [vmem:[%s4 + $0x90] sm:$0xff]
      %v1266 = vld [vmem:[%s4 + $0x98] sm:$0xff]
      %v1267 = vld [vmem:[%s4 + $0xa0] sm:$0xff]
      %v1268 = vld [vmem:[%s4 + $0xa8] sm:$0xff]
      %v1269 = vld [vmem:[%s4 + $0xb0] sm:$0xff]
      %v1270 = vld [vmem:[%s4 + $0xb8] sm:$0xff]
      %v1271 = vld [vmem:[%s4 + $0xc0] sm:$0xff]
      %v1272 = vld [vmem:[%s4 + $0xc8] sm:$0xff]
      %v1273 = vld [vmem:[%s4 + $0xd0] sm:$0xff]
      %v1274 = vld [vmem:[%s4 + $0xd8] sm:$0xff]
      %v1275 = vld [vmem:[%s4 + $0xe0] sm:$0xff]
      %v1276 = vld [vmem:[%s4 + $0xe8] sm:$0xff]
      %v1277 = vld [vmem:[%s4 + $0xf0] sm:$0xff]
      %v1278 = vld [vmem:[%s4 + $0xf8] sm:$0xff]
      %v1279 = vld [vmem:[%s4 + $0x100] sm:$0xff]
      %v1280 = vld [vmem:[%s4 + $0x108] sm:$0xff]
      %v1281 = vld [vmem:[%s4 + $0x110] sm:$0xff]
      %v1282 = vld [vmem:[%s4 + $0x118] sm:$0xff]
      %v1283 = vld [vmem:[%s4 + $0x120] sm:$0xff]
      %v1284 = vld [vmem:[%s4 + $0x128] sm:$0xff]
      %v1285 = vld [vmem:[%s4 + $0x130] sm:$0xff]
      %v1286 = vld [vmem:[%s4 + $0x138] sm:$0xff]
      %v1287 = vld [vmem:[%s4 + $0x140] sm:$0xff]
      %v1288 = vld [vmem:[%s4 + $0x148] sm:$0xff]
      %v1289 = vld [vmem:[%s4 + $0x150] sm:$0xff]
      %v1290 = vld [vmem:[%s4 + $0x158] sm:$0xff]
      %v1291 = vld [vmem:[%s4 + $0x160] sm:$0xff]
      %v1292 = vld [vmem:[%s4 + $0x168] sm:$0xff]
      %v1293 = vld [vmem:[%s4 + $0x170] sm:$0xff]
      %v1294 = vld [vmem:[%s4 + $0x178] sm:$0xff]
      %v1295 = vld [vmem:[%s4 + $0x180] sm:$0xff]
      %v1296 = vld [vmem:[%s4 + $0x188] sm:$0xff]
      %v1297 = vld [vmem:[%s4 + $0x190] sm:$0xff]
      %v1298 = vld [vmem:[%s4 + $0x198] sm:$0xff]
      %v1299 = vld [vmem:[%s4 + $0x1a0] sm:$0xff]
      %v1300 = vld [vmem:[%s4 + $0x1a8] sm:$0xff]
      %v1301 = vld [vmem:[%s4 + $0x1b0] sm:$0xff]
      %v1302 = vld [vmem:[%s4 + $0x1b8] sm:$0xff]
      %v1303 = vld [vmem:[%s4 + $0x1c0] sm:$0xff]
      %v1304 = vld [vmem:[%s4 + $0x1c8] sm:$0xff]
      %v1305 = vld [vmem:[%s4 + $0x1d0] sm:$0xff]
      %v1306 = vld [vmem:[%s4 + $0x1d8] sm:$0xff]
      %v1307 = vld [vmem:[%s4 + $0x1e0] sm:$0xff]
      %v1308 = vld [vmem:[%s4 + $0x1e8] sm:$0xff]
      %v1309 = vld [vmem:[%s4 + $0x1f0] sm:$0xff]
      %v1310 = vld [vmem:[%s4 + $0x1f8] sm:$0xff]
      %v1311 = vld [vmem:[%s4 + $0x200] sm:$0xff]
      %v1312 = vld [vmem:[%s4 + $0x208] sm:$0xff]
      %v1313 = vld [vmem:[%s4 + $0x210] sm:$0xff]
      %v1314 = vld [vmem:[%s4 + $0x218] sm:$0xff]
      %v1315 = vld [vmem:[%s4 + $0x220] sm:$0xff]
      %v1316 = vld [vmem:[%s4 + $0x228] sm:$0xff]
      %v1317 = vld [vmem:[%s4 + $0x230] sm:$0xff]
      %v1318 = vld [vmem:[%s4 + $0x238] sm:$0xff]
      %v1319 = vld [vmem:[%s4 + $0x240] sm:$0xff]
      %v1320 = vld [vmem:[%s4 + $0x248] sm:$0xff]
      %v1321 = vld [vmem:[%s4 + $0x250] sm:$0xff]
      %v1322 = vld [vmem:[%s4 + $0x258] sm:$0xff]
      %v1323 = vld [vmem:[%s4 + $0x260] sm:$0xff]
      %v1324 = vld [vmem:[%s4 + $0x268] sm:$0xff]
      %v1325 = vld [vmem:[%s4 + $0x270] sm:$0xff]
      %v1326 = vld [vmem:[%s4 + $0x278] sm:$0xff]
      %v1327 = vld [vmem:[%s4 + $0x280] sm:$0xff]
      %v1328 = vld [vmem:[%s4 + $0x288] sm:$0xff]
      %v1329 = vld [vmem:[%s4 + $0x290] sm:$0xff]
      %v1330 = vld [vmem:[%s4 + $0x298] sm:$0xff]
      %v1331 = vld [vmem:[%s4 + $0x2a0] sm:$0xff]
      %v1332 = vld [vmem:[%s4 + $0x2a8] sm:$0xff]
      %v1333 = vld [vmem:[%s4 + $0x2b0] sm:$0xff]
      %v1334 = vld [vmem:[%s4 + $0x2b8] sm:$0xff]
      %v1335 = vld [vmem:[%s4 + $0x2c0] sm:$0xff]
      %v1336 = vld [vmem:[%s4 + $0x2c8] sm:$0xff]
      %v1337 = vld [vmem:[%s4 + $0x2d0] sm:$0xff]
      %v1338 = vld [vmem:[%s4 + $0x2d8] sm:$0xff]
      %v1339 = vld [vmem:[%s4 + $0x2e0] sm:$0xff]
      %v1340 = vld [vmem:[%s4 + $0x2e8] sm:$0xff]
      %v1341 = vld [vmem:[%s4 + $0x2f0] sm:$0xff]
      %v1342 = vld [vmem:[%s4 + $0x2f8] sm:$0xff]
      %v1343 = vld [vmem:[%s4 + $0x300] sm:$0xff]
      %v1344 = vld [vmem:[%s4 + $0x308] sm:$0xff]
      %v1345 = vld [vmem:[%s4 + $0x310] sm:$0xff]
      %v1346 = vld [vmem:[%s4 + $0x318] sm:$0xff]
      %v1347 = vld [vmem:[%s4 + $0x320] sm:$0xff]
      %v1348 = vld [vmem:[%s4 + $0x328] sm:$0xff]
      %v1349 = vld [vmem:[%s4 + $0x330] sm:$0xff]
      %v1350 = vld [vmem:[%s4 + $0x338] sm:$0xff]
      %v1351 = vld [vmem:[%s4 + $0x340] sm:$0xff]
      %v1352 = vld [vmem:[%s4 + $0x348] sm:$0xff]
      %v1353 = vld [vmem:[%s4 + $0x350] sm:$0xff]
      %v1354 = vld [vmem:[%s4 + $0x358] sm:$0xff]
      %v1355 = vld [vmem:[%s4 + $0x360] sm:$0xff]
      %v1356 = vld [vmem:[%s4 + $0x368] sm:$0xff]
      %v1357 = vld [vmem:[%s4 + $0x370] sm:$0xff]
      %v1358 = vld [vmem:[%s4 + $0x378] sm:$0xff]
      %v1359 = vld [vmem:[%s4 + $0x380] sm:$0xff]
      %v1360 = vld [vmem:[%s4 + $0x388] sm:$0xff]
      %v1361 = vld [vmem:[%s4 + $0x390] sm:$0xff]
      %v1362 = vld [vmem:[%s4 + $0x398] sm:$0xff]
      %v1363 = vld [vmem:[%s4 + $0x3a0] sm:$0xff]
      %v1364 = vld [vmem:[%s4 + $0x3a8] sm:$0xff]
      %v1365 = vld [vmem:[%s4 + $0x3b0] sm:$0xff]
      %v1366 = vld [vmem:[%s4 + $0x3b8] sm:$0xff]
      %v1367 = vld [vmem:[%s4 + $0x3c0] sm:$0xff]
      %v1368 = vld [vmem:[%s4 + $0x3c8] sm:$0xff]
      %v1369 = vld [vmem:[%s4 + $0x3d0] sm:$0xff]
      %v1370 = vld [vmem:[%s4 + $0x3d8] sm:$0xff]
      %v1371 = vld [vmem:[%s4 + $0x3e0] sm:$0xff]
      %v1372 = vld [vmem:[%s4 + $0x3e8] sm:$0xff]
      %v1373 = vld [vmem:[%s4 + $0x3f0] sm:$0xff]
      %v1374 = vld [vmem:[%s4 + $0x3f8] sm:$0xff]
      %v1375 = vld [vmem:[%s4 + $0x400] sm:$0xff]
      %v1376 = vld [vmem:[%s4 + $0x408] sm:$0xff]
      %v1377 = vld [vmem:[%s4 + $0x410] sm:$0xff]
      %v1378 = vld [vmem:[%s4 + $0x418] sm:$0xff]
      %v1379 = vld [vmem:[%s4 + $0x420] sm:$0xff]
      %v1380 = vld [vmem:[%s4 + $0x428] sm:$0xff]
      %v1381 = vld [vmem:[%s4 + $0x430] sm:$0xff]
      %v1382 = vld [vmem:[%s4 + $0x438] sm:$0xff]
      %v1383 = vld [vmem:[%s4 + $0x440] sm:$0xff]
      %v1384 = vld [vmem:[%s4 + $0x448] sm:$0xff]
      %v1385 = vld [vmem:[%s4 + $0x450] sm:$0xff]
      %v1386 = vld [vmem:[%s4 + $0x458] sm:$0xff]
      %v1387 = vld [vmem:[%s4 + $0x460] sm:$0xff]
      %v1388 = vld [vmem:[%s4 + $0x468] sm:$0xff]
      %v1389 = vld [vmem:[%s4 + $0x470] sm:$0xff]
      %v1390 = vld [vmem:[%s4 + $0x478] sm:$0xff]
      %1391 = vmatprep.subr.mxu0 0.0
      %1392 = vmatpush1.msra.mxu0 %v1262
      %1393 = vmatprep.subr.mxu0 0.0
      %1394 = vmatpush1.msra.mxu0 %v1261
      %1395 = vmatprep.subr.mxu0 0.0
      %1396 = vmatpush1.msra.mxu0 %v1260
      %1397 = vmatprep.subr.mxu0 0.0
      %1398 = vmatpush1.msra.mxu0 %v1259
      %1399 = vmatprep.subr.mxu0 0.0
      %1400 = vmatpush1.msra.mxu0 %v1258
      %1401 = vmatprep.subr.mxu0 0.0
      %1402 = vmatpush1.msra.mxu0 %v1257
      %1403 = vmatprep.subr.mxu0 0.0
      %1404 = vmatpush1.msra.mxu0 %v1256
      %1405 = vmatprep.subr.mxu0 0.0
      %1406 = vmatpush1.msra.mxu0 %v1255
      %1407 = vmatprep.subr.mxu0 0.0
      %1408 = vmatpush1.msra.mxu0 %v1254
      %1409 = vmatprep.subr.mxu0 0.0
      %1410 = vmatpush1.msra.mxu0 %v1253
      %1411 = vmatprep.subr.mxu0 0.0
      %1412 = vmatpush1.msra.mxu0 %v1252
      %1413 = vmatprep.subr.mxu0 0.0
      %1414 = vmatpush1.msra.mxu0 %v1251
      %1415 = vmatprep.subr.mxu0 0.0
      %1416 = vmatpush1.msra.mxu0 %v1250
      %1417 = vmatprep.subr.mxu0 0.0
      %1418 = vmatpush1.msra.mxu0 %v1249
      %1419 = vmatprep.subr.mxu0 0.0
      %1420 = vmatpush1.msra.mxu0 %v1248
      %1421 = vmatprep.subr.mxu0 0.0
      %1422 = vmatpush1.msra.mxu0 %v1247
      %1423 = vmatprep.subr.mxu0 0.0
      %1424 = vmatpush2.msra.mxu0 %v1278
      %1425 = vmatprep.subr.mxu0 0.0
      %1426 = vmatpush2.msra.mxu0 %v1277
      %1427 = vmatprep.subr.mxu0 0.0
      %1428 = vmatpush2.msra.mxu0 %v1276
      %1429 = vmatprep.subr.mxu0 0.0
      %1430 = vmatpush2.msra.mxu0 %v1275
      %1431 = vmatprep.subr.mxu0 0.0
      %1432 = vmatpush2.msra.mxu0 %v1274
      %1433 = vmatprep.subr.mxu0 0.0
      %1434 = vmatpush2.msra.mxu0 %v1273
      %1435 = vmatprep.subr.mxu0 0.0
      %1436 = vmatpush2.msra.mxu0 %v1272
      %1437 = vmatprep.subr.mxu0 0.0
      %1438 = vmatpush2.msra.mxu0 %v1271
      %1439 = vmatprep.subr.mxu0 0.0
      %1440 = vmatpush2.msra.mxu0 %v1270
      %1441 = vmatprep.subr.mxu0 0.0
      %1442 = vmatpush2.msra.mxu0 %v1269
      %1443 = vmatprep.subr.mxu0 0.0
      %1444 = vmatpush2.msra.mxu0 %v1268
      %1445 = vmatprep.subr.mxu0 0.0
      %1446 = vmatpush2.msra.mxu0 %v1267
      %1447 = vmatprep.subr.mxu0 0.0
      %1448 = vmatpush2.msra.mxu0 %v1266
      %1449 = vmatprep.subr.mxu0 0.0
      %1450 = vmatpush2.msra.mxu0 %v1265
      %1451 = vmatprep.subr.mxu0 0.0
      %1452 = vmatpush2.msra.mxu0 %v1264
      %1453 = vmatprep.subr.mxu0 0.0
      %1454 = vmatpush2.msra.mxu0 %v1263
      %1455 = vmatprep.mubr.f32.mxu0 %v1182
      %1456 = vmatmul.mubr.f32.gmra.mxu0 %v1174
      %v1457 = vpop.f32.mrf.mxu0
      %v1458 = vadd.f32 0.0, %v1457
      %v1459 = vpop.f32.mrf.mxu0
      %1460 = vmatprep.mubr.f32.mxu0 %v1183
      %1461 = vmatmul.mubr.f32.gmra.mxu0 %v1175
      %v1462 = vpop.f32.mrf.mxu0
      %v1463 = vadd.f32 0.0, %v1462
      %v1464 = vpop.f32.mrf.mxu0
      %1465 = vmatprep.mubr.f32.mxu0 %v1184
      %1466 = vmatmul.mubr.f32.gmra.mxu0 %v1176
      %v1467 = vpop.f32.mrf.mxu0
      %v1468 = vadd.f32 0.0, %v1467
      %v1469 = vpop.f32.mrf.mxu0
      %1470 = vmatprep.mubr.f32.mxu0 %v1185
      %1471 = vmatmul.mubr.f32.gmra.mxu0 %v1177
      %v1472 = vpop.f32.mrf.mxu0
      %v1473 = vadd.f32 0.0, %v1472
      %v1474 = vpop.f32.mrf.mxu0
      %1475 = vmatprep.mubr.f32.mxu0 %v1186
      %1476 = vmatmul.mubr.f32.gmra.mxu0 %v1178
      %v1477 = vpop.f32.mrf.mxu0
      %v1478 = vadd.f32 0.0, %v1477
      %v1479 = vpop.f32.mrf.mxu0
      %1480 = vmatprep.mubr.f32.mxu0 %v1187
      %1481 = vmatmul.mubr.f32.gmra.mxu0 %v1179
      %v1482 = vpop.f32.mrf.mxu0
      %v1483 = vadd.f32 0.0, %v1482
      %v1484 = vpop.f32.mrf.mxu0
      %1485 = vmatprep.mubr.f32.mxu0 %v1188
      %1486 = vmatmul.mubr.f32.gmra.mxu0 %v1180
      %v1487 = vpop.f32.mrf.mxu0
      %v1488 = vadd.f32 0.0, %v1487
      %v1489 = vpop.f32.mrf.mxu0
      %1490 = vmatprep.mubr.f32.mxu0 %v1189
      %1491 = vmatmul.mubr.f32.gmra.mxu0 %v1181
      %v1492 = vpop.f32.mrf.mxu0
      %v1493 = vadd.f32 0.0, %v1492
      %v1494 = vpop.f32.mrf.mxu0
      %1495 = vdwg.mxu0
      %1496 = vmatprep.subr.mxu0 0.0
      %1497 = vmatpush1.msra.mxu0 %v1294
      %1498 = vmatprep.subr.mxu0 0.0
      %1499 = vmatpush1.msra.mxu0 %v1293
      %1500 = vmatprep.subr.mxu0 0.0
      %1501 = vmatpush1.msra.mxu0 %v1292
      %1502 = vmatprep.subr.mxu0 0.0
      %1503 = vmatpush1.msra.mxu0 %v1291
      %1504 = vmatprep.subr.mxu0 0.0
      %1505 = vmatpush1.msra.mxu0 %v1290
      %1506 = vmatprep.subr.mxu0 0.0
      %1507 = vmatpush1.msra.mxu0 %v1289
      %1508 = vmatprep.subr.mxu0 0.0
      %1509 = vmatpush1.msra.mxu0 %v1288
      %1510 = vmatprep.subr.mxu0 0.0
      %1511 = vmatpush1.msra.mxu0 %v1287
      %1512 = vmatprep.subr.mxu0 0.0
      %1513 = vmatpush1.msra.mxu0 %v1286
      %1514 = vmatprep.subr.mxu0 0.0
      %1515 = vmatpush1.msra.mxu0 %v1285
      %1516 = vmatprep.subr.mxu0 0.0
      %1517 = vmatpush1.msra.mxu0 %v1284
      %1518 = vmatprep.subr.mxu0 0.0
      %1519 = vmatpush1.msra.mxu0 %v1283
      %1520 = vmatprep.subr.mxu0 0.0
      %1521 = vmatpush1.msra.mxu0 %v1282
      %1522 = vmatprep.subr.mxu0 0.0
      %1523 = vmatpush1.msra.mxu0 %v1281
      %1524 = vmatprep.subr.mxu0 0.0
      %1525 = vmatpush1.msra.mxu0 %v1280
      %1526 = vmatprep.subr.mxu0 0.0
      %1527 = vmatpush1.msra.mxu0 %v1279
      %1528 = vmatprep.subr.mxu0 0.0
      %1529 = vmatpush2.msra.mxu0 %v1310
      %1530 = vmatprep.subr.mxu0 0.0
      %1531 = vmatpush2.msra.mxu0 %v1309
      %1532 = vmatprep.subr.mxu0 0.0
      %1533 = vmatpush2.msra.mxu0 %v1308
      %1534 = vmatprep.subr.mxu0 0.0
      %1535 = vmatpush2.msra.mxu0 %v1307
      %1536 = vmatprep.subr.mxu0 0.0
      %1537 = vmatpush2.msra.mxu0 %v1306
      %1538 = vmatprep.subr.mxu0 0.0
      %1539 = vmatpush2.msra.mxu0 %v1305
      %1540 = vmatprep.subr.mxu0 0.0
      %1541 = vmatpush2.msra.mxu0 %v1304
      %1542 = vmatprep.subr.mxu0 0.0
      %1543 = vmatpush2.msra.mxu0 %v1303
      %1544 = vmatprep.subr.mxu0 0.0
      %1545 = vmatpush2.msra.mxu0 %v1302
      %1546 = vmatprep.subr.mxu0 0.0
      %1547 = vmatpush2.msra.mxu0 %v1301
      %1548 = vmatprep.subr.mxu0 0.0
      %1549 = vmatpush2.msra.mxu0 %v1300
      %1550 = vmatprep.subr.mxu0 0.0
      %1551 = vmatpush2.msra.mxu0 %v1299
      %1552 = vmatprep.subr.mxu0 0.0
      %1553 = vmatpush2.msra.mxu0 %v1298
      %1554 = vmatprep.subr.mxu0 0.0
      %1555 = vmatpush2.msra.mxu0 %v1297
      %1556 = vmatprep.subr.mxu0 0.0
      %1557 = vmatpush2.msra.mxu0 %v1296
      %1558 = vmatprep.subr.mxu0 0.0
      %1559 = vmatpush2.msra.mxu0 %v1295
      %1560 = vmatprep.mubr.f32.mxu0 %v1198
      %1561 = vmatmul.mubr.f32.gmra.mxu0 %v1190
      %v1562 = vpop.f32.mrf.mxu0
      %v1563 = vadd.f32 %v1458, %v1562
      %v1564 = vpop.f32.mrf.mxu0
      %1565 = vmatprep.mubr.f32.mxu0 %v1199
      %1566 = vmatmul.mubr.f32.gmra.mxu0 %v1191
      %v1567 = vpop.f32.mrf.mxu0
      %v1568 = vadd.f32 %v1463, %v1567
      %v1569 = vpop.f32.mrf.mxu0
      %1570 = vmatprep.mubr.f32.mxu0 %v1200
      %1571 = vmatmul.mubr.f32.gmra.mxu0 %v1192
      %v1572 = vpop.f32.mrf.mxu0
      %v1573 = vadd.f32 %v1468, %v1572
      %v1574 = vpop.f32.mrf.mxu0
      %1575 = vmatprep.mubr.f32.mxu0 %v1201
      %1576 = vmatmul.mubr.f32.gmra.mxu0 %v1193
      %v1577 = vpop.f32.mrf.mxu0
      %v1578 = vadd.f32 %v1473, %v1577
      %v1579 = vpop.f32.mrf.mxu0
      %1580 = vmatprep.mubr.f32.mxu0 %v1202
      %1581 = vmatmul.mubr.f32.gmra.mxu0 %v1194
      %v1582 = vpop.f32.mrf.mxu0
      %v1583 = vadd.f32 %v1478, %v1582
      %v1584 = vpop.f32.mrf.mxu0
      %1585 = vmatprep.mubr.f32.mxu0 %v1203
      %1586 = vmatmul.mubr.f32.gmra.mxu0 %v1195
      %v1587 = vpop.f32.mrf.mxu0
      %v1588 = vadd.f32 %v1483, %v1587
      %v1589 = vpop.f32.mrf.mxu0
      %1590 = vmatprep.mubr.f32.mxu0 %v1204
      %1591 = vmatmul.mubr.f32.gmra.mxu0 %v1196
      %v1592 = vpop.f32.mrf.mxu0
      %v1593 = vadd.f32 %v1488, %v1592
      %v1594 = vpop.f32.mrf.mxu0
      %1595 = vmatprep.mubr.f32.mxu0 %v1205
      %1596 = vmatmul.mubr.f32.gmra.mxu0 %v1197
      %v1597 = vpop.f32.mrf.mxu0
      %v1598 = vadd.f32 %v1493, %v1597
      %v1599 = vpop.f32.mrf.mxu0
      %1600 = vdwg.mxu0
      %1601 = vmatprep.subr.mxu0 0.0
      %1602 = vmatpush1.msra.mxu0 %v1326
      %1603 = vmatprep.subr.mxu0 0.0
      %1604 = vmatpush1.msra.mxu0 %v1325
      %1605 = vmatprep.subr.mxu0 0.0
      %1606 = vmatpush1.msra.mxu0 %v1324
      %1607 = vmatprep.subr.mxu0 0.0
      %1608 = vmatpush1.msra.mxu0 %v1323
      %1609 = vmatprep.subr.mxu0 0.0
      %1610 = vmatpush1.msra.mxu0 %v1322
      %1611 = vmatprep.subr.mxu0 0.0
      %1612 = vmatpush1.msra.mxu0 %v1321
      %1613 = vmatprep.subr.mxu0 0.0
      %1614 = vmatpush1.msra.mxu0 %v1320
      %1615 = vmatprep.subr.mxu0 0.0
      %1616 = vmatpush1.msra.mxu0 %v1319
      %1617 = vmatprep.subr.mxu0 0.0
      %1618 = vmatpush1.msra.mxu0 %v1318
      %1619 = vmatprep.subr.mxu0 0.0
      %1620 = vmatpush1.msra.mxu0 %v1317
      %1621 = vmatprep.subr.mxu0 0.0
      %1622 = vmatpush1.msra.mxu0 %v1316
      %1623 = vmatprep.subr.mxu0 0.0
      %1624 = vmatpush1.msra.mxu0 %v1315
      %1625 = vmatprep.subr.mxu0 0.0
      %1626 = vmatpush1.msra.mxu0 %v1314
      %1627 = vmatprep.subr.mxu0 0.0
      %1628 = vmatpush1.msra.mxu0 %v1313
      %1629 = vmatprep.subr.mxu0 0.0
      %1630 = vmatpush1.msra.mxu0 %v1312
      %1631 = vmatprep.subr.mxu0 0.0
      %1632 = vmatpush1.msra.mxu0 %v1311
      %1633 = vmatprep.subr.mxu0 0.0
      %1634 = vmatpush2.msra.mxu0 %v1342
      %1635 = vmatprep.subr.mxu0 0.0
      %1636 = vmatpush2.msra.mxu0 %v1341
      %1637 = vmatprep.subr.mxu0 0.0
      %1638 = vmatpush2.msra.mxu0 %v1340
      %1639 = vmatprep.subr.mxu0 0.0
      %1640 = vmatpush2.msra.mxu0 %v1339
      %1641 = vmatprep.subr.mxu0 0.0
      %1642 = vmatpush2.msra.mxu0 %v1338
      %1643 = vmatprep.subr.mxu0 0.0
      %1644 = vmatpush2.msra.mxu0 %v1337
      %1645 = vmatprep.subr.mxu0 0.0
      %1646 = vmatpush2.msra.mxu0 %v1336
      %1647 = vmatprep.subr.mxu0 0.0
      %1648 = vmatpush2.msra.mxu0 %v1335
      %1649 = vmatprep.subr.mxu0 0.0
      %1650 = vmatpush2.msra.mxu0 %v1334
      %1651 = vmatprep.subr.mxu0 0.0
      %1652 = vmatpush2.msra.mxu0 %v1333
      %1653 = vmatprep.subr.mxu0 0.0
      %1654 = vmatpush2.msra.mxu0 %v1332
      %1655 = vmatprep.subr.mxu0 0.0
      %1656 = vmatpush2.msra.mxu0 %v1331
      %1657 = vmatprep.subr.mxu0 0.0
      %1658 = vmatpush2.msra.mxu0 %v1330
      %1659 = vmatprep.subr.mxu0 0.0
      %1660 = vmatpush2.msra.mxu0 %v1329
      %1661 = vmatprep.subr.mxu0 0.0
      %1662 = vmatpush2.msra.mxu0 %v1328
      %1663 = vmatprep.subr.mxu0 0.0
      %1664 = vmatpush2.msra.mxu0 %v1327
      %1665 = vmatprep.mubr.f32.mxu0 %v1214
      %1666 = vmatmul.mubr.f32.gmra.mxu0 %v1206
      %v1667 = vpop.f32.mrf.mxu0
      %v1668 = vadd.f32 %v1563, %v1667
      %v1669 = vpop.f32.mrf.mxu0
      %1670 = vmatprep.mubr.f32.mxu0 %v1215
      %1671 = vmatmul.mubr.f32.gmra.mxu0 %v1207
      %v1672 = vpop.f32.mrf.mxu0
      %v1673 = vadd.f32 %v1568, %v1672
      %v1674 = vpop.f32.mrf.mxu0
      %1675 = vmatprep.mubr.f32.mxu0 %v1216
      %1676 = vmatmul.mubr.f32.gmra.mxu0 %v1208
      %v1677 = vpop.f32.mrf.mxu0
      %v1678 = vadd.f32 %v1573, %v1677
      %v1679 = vpop.f32.mrf.mxu0
      %1680 = vmatprep.mubr.f32.mxu0 %v1217
      %1681 = vmatmul.mubr.f32.gmra.mxu0 %v1209
      %v1682 = vpop.f32.mrf.mxu0
      %v1683 = vadd.f32 %v1578, %v1682
      %v1684 = vpop.f32.mrf.mxu0
      %1685 = vmatprep.mubr.f32.mxu0 %v1218
      %1686 = vmatmul.mubr.f32.gmra.mxu0 %v1210
      %v1687 = vpop.f32.mrf.mxu0
      %v1688 = vadd.f32 %v1583, %v1687
      %v1689 = vpop.f32.mrf.mxu0
      %1690 = vmatprep.mubr.f32.mxu0 %v1219
      %1691 = vmatmul.mubr.f32.gmra.mxu0 %v1211
      %v1692 = vpop.f32.mrf.mxu0
      %v1693 = vadd.f32 %v1588, %v1692
      %v1694 = vpop.f32.mrf.mxu0
      %1695 = vmatprep.mubr.f32.mxu0 %v1220
      %1696 = vmatmul.mubr.f32.gmra.mxu0 %v1212
      %v1697 = vpop.f32.mrf.mxu0
      %v1698 = vadd.f32 %v1593, %v1697
      %v1699 = vpop.f32.mrf.mxu0
      %1700 = vmatprep.mubr.f32.mxu0 %v1221
      %1701 = vmatmul.mubr.f32.gmra.mxu0 %v1213
      %v1702 = vpop.f32.mrf.mxu0
      %v1703 = vadd.f32 %v1598, %v1702
      %v1704 = vpop.f32.mrf.mxu0
      %1705 = vdwg.mxu0
      %1706 = vmatprep.subr.mxu0 0.0
      %1707 = vmatpush1.msra.mxu0 %v1358
      %1708 = vmatprep.subr.mxu0 0.0
      %1709 = vmatpush1.msra.mxu0 %v1357
      %1710 = vmatprep.subr.mxu0 0.0
      %1711 = vmatpush1.msra.mxu0 %v1356
      %1712 = vmatprep.subr.mxu0 0.0
      %1713 = vmatpush1.msra.mxu0 %v1355
      %1714 = vmatprep.subr.mxu0 0.0
      %1715 = vmatpush1.msra.mxu0 %v1354
      %1716 = vmatprep.subr.mxu0 0.0
      %1717 = vmatpush1.msra.mxu0 %v1353
      %1718 = vmatprep.subr.mxu0 0.0
      %1719 = vmatpush1.msra.mxu0 %v1352
      %1720 = vmatprep.subr.mxu0 0.0
      %1721 = vmatpush1.msra.mxu0 %v1351
      %1722 = vmatprep.subr.mxu0 0.0
      %1723 = vmatpush1.msra.mxu0 %v1350
      %1724 = vmatprep.subr.mxu0 0.0
      %1725 = vmatpush1.msra.mxu0 %v1349
      %1726 = vmatprep.subr.mxu0 0.0
      %1727 = vmatpush1.msra.mxu0 %v1348
      %1728 = vmatprep.subr.mxu0 0.0
      %1729 = vmatpush1.msra.mxu0 %v1347
      %1730 = vmatprep.subr.mxu0 0.0
      %1731 = vmatpush1.msra.mxu0 %v1346
      %1732 = vmatprep.subr.mxu0 0.0
      %1733 = vmatpush1.msra.mxu0 %v1345
      %1734 = vmatprep.subr.mxu0 0.0
      %1735 = vmatpush1.msra.mxu0 %v1344
      %1736 = vmatprep.subr.mxu0 0.0
      %1737 = vmatpush1.msra.mxu0 %v1343
      %1738 = vmatprep.subr.mxu0 0.0
      %1739 = vmatpush2.msra.mxu0 %v1374
      %1740 = vmatprep.subr.mxu0 0.0
      %1741 = vmatpush2.msra.mxu0 %v1373
      %1742 = vmatprep.subr.mxu0 0.0
      %1743 = vmatpush2.msra.mxu0 %v1372
      %1744 = vmatprep.subr.mxu0 0.0
      %1745 = vmatpush2.msra.mxu0 %v1371
      %1746 = vmatprep.subr.mxu0 0.0
      %1747 = vmatpush2.msra.mxu0 %v1370
      %1748 = vmatprep.subr.mxu0 0.0
      %1749 = vmatpush2.msra.mxu0 %v1369
      %1750 = vmatprep.subr.mxu0 0.0
      %1751 = vmatpush2.msra.mxu0 %v1368
      %1752 = vmatprep.subr.mxu0 0.0
      %1753 = vmatpush2.msra.mxu0 %v1367
      %1754 = vmatprep.subr.mxu0 0.0
      %1755 = vmatpush2.msra.mxu0 %v1366
      %1756 = vmatprep.subr.mxu0 0.0
      %1757 = vmatpush2.msra.mxu0 %v1365
      %1758 = vmatprep.subr.mxu0 0.0
      %1759 = vmatpush2.msra.mxu0 %v1364
      %1760 = vmatprep.subr.mxu0 0.0
      %1761 = vmatpush2.msra.mxu0 %v1363
      %1762 = vmatprep.subr.mxu0 0.0
      %1763 = vmatpush2.msra.mxu0 %v1362
      %1764 = vmatprep.subr.mxu0 0.0
      %1765 = vmatpush2.msra.mxu0 %v1361
      %1766 = vmatprep.subr.mxu0 0.0
      %1767 = vmatpush2.msra.mxu0 %v1360
      %1768 = vmatprep.subr.mxu0 0.0
      %1769 = vmatpush2.msra.mxu0 %v1359
      %1770 = vmatprep.mubr.f32.mxu0 %v1231
      %1771 = vmatmul.mubr.f32.gmra.mxu0 %v1223
      %v1772 = vpop.f32.mrf.mxu0
      %v1773 = vadd.f32 %v1668, %v1772
      %v1774 = vpop.f32.mrf.mxu0
      %1775 = vmatprep.mubr.f32.mxu0 %v1232
      %1776 = vmatmul.mubr.f32.gmra.mxu0 %v1224
      %v1777 = vpop.f32.mrf.mxu0
      %v1778 = vadd.f32 %v1673, %v1777
      %v1779 = vpop.f32.mrf.mxu0
      %1780 = vmatprep.mubr.f32.mxu0 %v1233
      %1781 = vmatmul.mubr.f32.gmra.mxu0 %v1225
      %v1782 = vpop.f32.mrf.mxu0
      %v1783 = vadd.f32 %v1678, %v1782
      %v1784 = vpop.f32.mrf.mxu0
      %1785 = vmatprep.mubr.f32.mxu0 %v1234
      %1786 = vmatmul.mubr.f32.gmra.mxu0 %v1226
      %v1787 = vpop.f32.mrf.mxu0
      %v1788 = vadd.f32 %v1683, %v1787
      %v1789 = vpop.f32.mrf.mxu0
      %1790 = vmatprep.mubr.f32.mxu0 %v1235
      %1791 = vmatmul.mubr.f32.gmra.mxu0 %v1227
      %v1792 = vpop.f32.mrf.mxu0
      %v1793 = vadd.f32 %v1688, %v1792
      %v1794 = vpop.f32.mrf.mxu0
      %1795 = vmatprep.mubr.f32.mxu0 %v1236
      %1796 = vmatmul.mubr.f32.gmra.mxu0 %v1228
      %v1797 = vpop.f32.mrf.mxu0
      %v1798 = vadd.f32 %v1693, %v1797
      %v1799 = vpop.f32.mrf.mxu0
      %1800 = vmatprep.mubr.f32.mxu0 %v1237
      %1801 = vmatmul.mubr.f32.gmra.mxu0 %v1229
      %v1802 = vpop.f32.mrf.mxu0
      %v1803 = vadd.f32 %v1698, %v1802
      %v1804 = vpop.f32.mrf.mxu0
      %1805 = vmatprep.mubr.f32.mxu0 %v1238
      %1806 = vmatmul.mubr.f32.gmra.mxu0 %v1230
      %v1807 = vpop.f32.mrf.mxu0
      %v1808 = vadd.f32 %v1703, %v1807
      %v1809 = vpop.f32.mrf.mxu0
      %1810 = vdwg.mxu0
      %1811 = vmatprep.subr.mxu0 0.0
      %1812 = vmatpush1.msra.mxu0 %v1390
      %1813 = vmatprep.subr.mxu0 0.0
      %1814 = vmatpush1.msra.mxu0 %v1389
      %1815 = vmatprep.subr.mxu0 0.0
      %1816 = vmatpush1.msra.mxu0 %v1388
      %1817 = vmatprep.subr.mxu0 0.0
      %1818 = vmatpush1.msra.mxu0 %v1387
      %1819 = vmatprep.subr.mxu0 0.0
      %1820 = vmatpush1.msra.mxu0 %v1386
      %1821 = vmatprep.subr.mxu0 0.0
      %1822 = vmatpush1.msra.mxu0 %v1385
      %1823 = vmatprep.subr.mxu0 0.0
      %1824 = vmatpush1.msra.mxu0 %v1384
      %1825 = vmatprep.subr.mxu0 0.0
      %1826 = vmatpush1.msra.mxu0 %v1383
      %1827 = vmatprep.subr.mxu0 0.0
      %1828 = vmatpush1.msra.mxu0 %v1382
      %1829 = vmatprep.subr.mxu0 0.0
      %1830 = vmatpush1.msra.mxu0 %v1381
      %1831 = vmatprep.subr.mxu0 0.0
      %1832 = vmatpush1.msra.mxu0 %v1380
      %1833 = vmatprep.subr.mxu0 0.0
      %1834 = vmatpush1.msra.mxu0 %v1379
      %1835 = vmatprep.subr.mxu0 0.0
      %1836 = vmatpush1.msra.mxu0 %v1378
      %1837 = vmatprep.subr.mxu0 0.0
      %1838 = vmatpush1.msra.mxu0 %v1377
      %1839 = vmatprep.subr.mxu0 0.0
      %1840 = vmatpush1.msra.mxu0 %v1376
      %1841 = vmatprep.subr.mxu0 0.0
      %1842 = vmatpush1.msra.mxu0 %v1375
      %1843 = vmatprep.subr.mxu0 0.0
      %1844 = vmatpush2.msra.mxu0 0.0
      %1845 = vmatprep.subr.mxu0 0.0
      %1846 = vmatpush2.msra.mxu0 0.0
      %1847 = vmatprep.subr.mxu0 0.0
      %1848 = vmatpush2.msra.mxu0 0.0
      %1849 = vmatprep.subr.mxu0 0.0
      %1850 = vmatpush2.msra.mxu0 0.0
      %1851 = vmatprep.subr.mxu0 0.0
      %1852 = vmatpush2.msra.mxu0 0.0
      %1853 = vmatprep.subr.mxu0 0.0
      %1854 = vmatpush2.msra.mxu0 0.0
      %1855 = vmatprep.subr.mxu0 0.0
      %1856 = vmatpush2.msra.mxu0 0.0
      %1857 = vmatprep.subr.mxu0 0.0
      %1858 = vmatpush2.msra.mxu0 0.0
      %1859 = vmatprep.subr.mxu0 0.0
      %1860 = vmatpush2.msra.mxu0 0.0
      %1861 = vmatprep.subr.mxu0 0.0
      %1862 = vmatpush2.msra.mxu0 0.0
      %1863 = vmatprep.subr.mxu0 0.0
      %1864 = vmatpush2.msra.mxu0 0.0
      %1865 = vmatprep.subr.mxu0 0.0
      %1866 = vmatpush2.msra.mxu0 0.0
      %1867 = vmatprep.subr.mxu0 0.0
      %1868 = vmatpush2.msra.mxu0 0.0
      %1869 = vmatprep.subr.mxu0 0.0
      %1870 = vmatpush2.msra.mxu0 0.0
      %1871 = vmatprep.subr.mxu0 0.0
      %1872 = vmatpush2.msra.mxu0 0.0
      %1873 = vmatprep.subr.mxu0 0.0
      %1874 = vmatpush2.msra.mxu0 0.0
      %1875 = vmatprep.mubr.f32.mxu0 0.0
      %1876 = vmatmul.mubr.f32.gmra.mxu0 %v1239
      %v1877 = vpop.f32.mrf.mxu0
      %v1878 = vadd.f32 %v1773, %v1877
      %v1879 = vpop.f32.mrf.mxu0
      %1880 = vmatprep.mubr.f32.mxu0 0.0
      %1881 = vmatmul.mubr.f32.gmra.mxu0 %v1240
      %v1882 = vpop.f32.mrf.mxu0
      %v1883 = vadd.f32 %v1778, %v1882
      %v1884 = vpop.f32.mrf.mxu0
      %1885 = vmatprep.mubr.f32.mxu0 0.0
      %1886 = vmatmul.mubr.f32.gmra.mxu0 %v1241
      %v1887 = vpop.f32.mrf.mxu0
      %v1888 = vadd.f32 %v1783, %v1887
      %v1889 = vpop.f32.mrf.mxu0
      %1890 = vmatprep.mubr.f32.mxu0 0.0
      %1891 = vmatmul.mubr.f32.gmra.mxu0 %v1242
      %v1892 = vpop.f32.mrf.mxu0
      %v1893 = vadd.f32 %v1788, %v1892
      %v1894 = vpop.f32.mrf.mxu0
      %1895 = vmatprep.mubr.f32.mxu0 0.0
      %1896 = vmatmul.mubr.f32.gmra.mxu0 %v1243
      %v1897 = vpop.f32.mrf.mxu0
      %v1898 = vadd.f32 %v1793, %v1897
      %v1899 = vpop.f32.mrf.mxu0
      %1900 = vmatprep.mubr.f32.mxu0 0.0
      %1901 = vmatmul.mubr.f32.gmra.mxu0 %v1244
      %v1902 = vpop.f32.mrf.mxu0
      %v1903 = vadd.f32 %v1798, %v1902
      %v1904 = vpop.f32.mrf.mxu0
      %1905 = vmatprep.mubr.f32.mxu0 0.0
      %1906 = vmatmul.mubr.f32.gmra.mxu0 %v1245
      %v1907 = vpop.f32.mrf.mxu0
      %v1908 = vadd.f32 %v1803, %v1907
      %v1909 = vpop.f32.mrf.mxu0
      %1910 = vmatprep.mubr.f32.mxu0 0.0
      %1911 = vmatmul.mubr.f32.gmra.mxu0 %v1246
      %v1912 = vpop.f32.mrf.mxu0
      %v1913 = vadd.f32 %v1808, %v1912
      %v1914 = vpop.f32.mrf.mxu0
      %1915 = vdwg.mxu0
      %v1916 = vld [vmem:[%s5] sm:$0x1]
      %v1918 = vlaneseq
      %v1919 = vshrl.u32 %v1918, 7
      %v1920 = vsub.s32 0, %v1919
      %v1921 = vrot.slane %v1916, %v1920
      %v1923 = vmul.f32 %v1878, %v1921
      %v1924 = vmul.f32 %v1883, %v1921
      %v1925 = vmul.f32 %v1888, %v1921
      %v1926 = vmul.f32 %v1893, %v1921
      %v1927 = vmul.f32 %v1898, %v1921
      %v1928 = vmul.f32 %v1903, %v1921
      %v1929 = vmul.f32 %v1908, %v1921
      %v1930 = vmul.f32 %v1913, %v1921
      %v1931 = vld [vmem:[%s6] sm:$0x1]
      %v1933 = vlaneseq
      %v1934 = vshrl.u32 %v1933, 7
      %v1935 = vsub.s32 0, %v1934
      %v1936 = vrot.slane %v1931, %v1935
      %v1938 = vadd.f32 %v1923, %v1936
      %v1939 = vadd.f32 %v1924, %v1936
      %v1940 = vadd.f32 %v1925, %v1936
      %v1941 = vadd.f32 %v1926, %v1936
      %v1942 = vadd.f32 %v1927, %v1936
      %v1943 = vadd.f32 %v1928, %v1936
      %v1944 = vadd.f32 %v1929, %v1936
      %v1945 = vadd.f32 %v1930, %v1936
      %v1946 = vmax.f32 %v1938, 0.0
      %v1947 = vmax.f32 %v1939, 0.0
      %v1948 = vmax.f32 %v1940, 0.0
      %v1949 = vmax.f32 %v1941, 0.0
      %v1950 = vmax.f32 %v1942, 0.0
      %v1951 = vmax.f32 %v1943, 0.0
      %v1952 = vmax.f32 %v1944, 0.0
      %v1953 = vmax.f32 %v1945, 0.0
      %1954 = vst [vmem:[%s278] sm:$0xff] %v1946
      %1955 = vst [vmem:[%s278 + $0x8] sm:$0xff] %v1947
      %1956 = vst [vmem:[%s278 + $0x10] sm:$0xff] %v1948
      %1957 = vst [vmem:[%s278 + $0x18] sm:$0xff] %v1949
      %1958 = vst [vmem:[%s278 + $0x20] sm:$0xff] %v1950
      %1959 = vst [vmem:[%s278 + $0x28] sm:$0xff] %v1951
      %1960 = vst [vmem:[%s278 + $0x30] sm:$0xff] %v1952
      %1961 = vst [vmem:[%s278 + $0x38] sm:$0xff] %v1953
      %p1962 = scmp.lt.s32.totalorder %s18, 1
      %s1963 = scalar_select %p1962, %s18, 1
      %s1964 = smul.addr %s1963, 8
      %s1965 = smul.addr %s1964, 8
      %s1966 = scalar_lea.vmem %s7, %s1965
      // Predicated region
      $region49: #{down_forward.1} parent=47 // pred_check
        %p1967 = pneg %p188
      $region50: #{down_forward.1} parent=47 // pred_check_branch
        %1969 = sbr.rel (%p1967) target = $region52
      $region51: #{down_forward.1} parent=47 // pred_region
        _
      $region52: #{down_forward.1} parent=47 // pred_fallthru
        _
    $region48: #{down_forward.1} parent=5 // pred_fallthru
      _
    %p1970 = scmp.le.s32.totalorder 2, %s13
    // Predicated region
    $region53: #{down_forward.1} parent=5 // pred_check
      %p1971 = pneg %p1970
    $region54: #{down_forward.1} parent=5 // pred_check_branch
      %1973 = sbr.rel (%p1971) target = $region56
    $region55: #{down_forward.1} parent=5 // pred_region
      %s1974 = ssub.s32 %s13, 2
      // Predicated region
      $region57: #{down_forward.1} parent=55 // pred_check
        %p1975 = pneg %p194
      $region58: #{down_forward.1} parent=55 // pred_check_branch
        %1977 = sbr.rel (%p1975) target = $region60
      $region59: #{down_forward.1} parent=55 // pred_region
        %p1978 = scmp.lt.s32.totalorder %s19, 1
        %s1979 = scalar_select %p1978, %s19, 1
        %s1980 = smul.addr %s1979, 8
        %s1981 = smul.addr %s1980, 8
        %s1982 = scalar_lea.vmem %s7, %s1981
      $region60: #{down_forward.1} parent=55 // pred_fallthru
        _
    $region56: #{down_forward.1} parent=5 // pred_fallthru
      _
  $region6: #{down_forward.1} parent=0 // loop_footer
    %s17 = sadd.s32 1, %s13
  $region7: #{down_forward.1} parent=0 // loop_footer_branch
    %12 = sbr.rel target = $region3
  $region8: #{down_forward.1} parent=0 // loop_exit
    _

</llo_original>
